<compile_context>
chip_gen: v7x
topology: tpu7x:2x2x1
jax: 0.10.0
libtpu: 0.0.40
codegen_flags: <defaults>
</compile_context>

<pallas_src>
import functools

import jax
import jax.numpy as jnp
from jax.experimental import pallas as pl
from jax.experimental.pallas import tpu as pltpu

EPS = 1e-5


def conv1x1_bn_kernel(w_ref, x_ref, gb_ref, o_ref, *, true_p):
    # w_ref:  [tile_cout, Cin]  f32  (cast to bf16 in-kernel for the MXU)
    # x_ref:  [Cin, P]          f32  (cast to bf16 in-kernel for the MXU)
    # gb_ref: [tile_cout, 2]    f32  (gamma, beta packed)
    # o_ref:  [tile_cout, P]    f32
    y = jnp.dot(w_ref[...].astype(jnp.bfloat16),
                x_ref[...].astype(jnp.bfloat16),
                preferred_element_type=jnp.float32)

    # Stage the conv result in VMEM so the big tile is not kept live in vregs
    # across the two lane reductions and the final affine (avoids spill code).
    o_ref[...] = y

    # Single-pass BatchNorm stats (training mode, biased variance); P is the
    # true pixel count.  All stats math stays in f32.
    inv_p = jnp.float32(1.0 / true_p)
    s1 = jnp.sum(o_ref[...], axis=1, keepdims=True)                 # [tc, 1]
    s2 = jnp.sum(o_ref[...] * o_ref[...], axis=1, keepdims=True)    # [tc, 1]
    mean = s1 * inv_p
    # Clamp: E[y^2] - mean^2 can go slightly negative from f32 cancellation.
    var = jnp.maximum(s2 * inv_p - mean * mean, 0.0)
    gamma = gb_ref[:, 0:1]
    beta = gb_ref[:, 1:2]
    scale = gamma * jax.lax.rsqrt(var + EPS)
    shift = beta - mean * scale
    o_ref[...] = o_ref[...] * scale + shift


def _num_grid_steps():
    """2-way Cout split only on dual-TensorCore chips (v7x); 1 otherwise."""
    try:
        kind = jax.devices()[0].device_kind.lower()
    except Exception:
        return 1
    return 2 if ("v7" in kind or "7x" in kind) else 1


def conv1x1_bn(x_nchw, weight, gamma, beta):
    """x_nchw: [N, Cin, H, W]; weight: [Cout, Cin]; gamma/beta: [Cout]."""
    n, c_in, h, w = x_nchw.shape
    c_out = weight.shape[0]
    p = n * h * w

    steps = _num_grid_steps()
    if c_out % steps != 0 or (c_out // steps) % 8 != 0:
        steps = 1
    tile_cout = c_out // steps

    # NCHW -> [Cin, P] (free for N == 1).  No pad, no host-side bf16 cast.
    # TODO(synk): for N > 1, fold this transpose into BlockSpec index_maps
    # (grid over N) instead of a separate XLA transpose pass.
    x2d = jnp.transpose(x_nchw, (1, 0, 2, 3)).reshape(c_in, p)
    gb = jnp.stack([gamma.astype(jnp.float32),
                    beta.astype(jnp.float32)], axis=1)          # [Cout, 2]
    w_f32 = weight.astype(jnp.float32)

    kernel = functools.partial(conv1x1_bn_kernel, true_p=p)

    # X block index never changes across the grid -> single-buffer it when
    # the grid actually has more than one step (v7x only).
    x_spec = pl.BlockSpec((c_in, p), lambda i: (0, 0))
    if steps > 1:
        try:
            x_spec = pl.BlockSpec((c_in, p), lambda i: (0, 0),
                                  pipeline_mode=pl.Buffered(1))
        except Exception:
            x_spec = pl.BlockSpec((c_in, p), lambda i: (0, 0))

    cost = pl.CostEstimate(
        flops=2 * c_out * c_in * p,
        transcendentals=c_out,  # one rsqrt per output channel
        bytes_accessed=(w_f32.size * 4 + x2d.size * 4 + gb.size * 4
                        + c_out * p * 4),
    )

    y2d = pl.pallas_call(
        kernel,
        out_shape=jax.ShapeDtypeStruct((c_out, p), jnp.float32),
        grid=(steps,),
        in_specs=[
            pl.BlockSpec((tile_cout, c_in), lambda i: (i, 0)),   # weight tile
            x_spec,                                              # full X2D
            pl.BlockSpec((tile_cout, 2), lambda i: (i, 0)),      # gamma|beta
        ],
        out_specs=pl.BlockSpec((tile_cout, p), lambda i: (i, 0)),
        compiler_params=pltpu.CompilerParams(
            dimension_semantics=("parallel",),   # shard Cout tiles across TCs
            vmem_limit_bytes=32 * 1024 * 1024,
        ),
        cost_estimate=cost,
    )(w_f32, x2d, gb)

    # [Cout, P] -> NCHW (no un-pad slice; output width is already exactly P).
    return jnp.transpose(y2d.reshape(c_out, n, h, w), (1, 0, 2, 3))


def reference(x_nchw, weight, gamma, beta):
    """Pure-JAX reference: 1x1 conv (bf16 operands, f32 acc) + BN batch stats."""
    y = jnp.einsum('oc,nchw->nohw',
                   weight.astype(jnp.bfloat16),
                   x_nchw.astype(jnp.bfloat16),
                   preferred_element_type=jnp.float32)
    mean = jnp.mean(y, axis=(0, 2, 3), keepdims=True)
    var = jnp.mean((y - mean) ** 2, axis=(0, 2, 3), keepdims=True)
    g = gamma.reshape(1, -1, 1, 1)
    b = beta.reshape(1, -1, 1, 1)
    return (y - mean) * jax.lax.rsqrt(var + EPS) * g + b


if __name__ == "__main__":
    N, C, H, W = 1, 352, 14, 14  # shapes implied by the module

    key = jax.random.PRNGKey(0)
    kx, kw = jax.random.split(key)
    x = jax.random.normal(kx, (N, C, H, W), dtype=jnp.float32)
    # Deterministic synthetic parameters (conv has no bias).
    weight = jax.random.normal(kw, (C, C), dtype=jnp.float32) * 0.05
    gamma = jnp.ones((C,), dtype=jnp.float32)    # BatchNorm2d default init
    beta = jnp.zeros((C,), dtype=jnp.float32)
    # TODO(synk): BatchNorm running_mean/running_var buffers are not updated
    # (only the normalized forward output is produced).

    out = jax.block_until_ready(conv1x1_bn(x, weight, gamma, beta))
    ref = jax.block_until_ready(reference(x, weight, gamma, beta))

    assert out.shape == (N, C, H, W)
    assert jnp.allclose(out, ref, atol=5e-3, rtol=5e-3), float(
        jnp.max(jnp.abs(out - ref)))

    print("KERNEL_OK")
</pallas_src>

<mosaic_0001>
module attributes {stable_mosaic.version = 11 : i64} {
  func.func @conv1x1_bn_kernel(%arg0: i32, %arg1: memref<352x352xf32, #tpu.memory_space<vmem>>, %arg2: memref<352x196xf32, #tpu.memory_space<vmem>>, %arg3: memref<352x2xf32, #tpu.memory_space<vmem>>, %arg4: memref<352x196xf32, #tpu.memory_space<vmem>>) attributes {dimension_semantics = [#tpu.dimension_semantics<parallel>], iteration_bounds = array<i64: 1>, scalar_prefetch = 0 : i64, scratch_operands = 0 : i64, tpu.core_type = #tpu.core_type<tc>, window_params = [{transform_indices = @transform_0, window_bounds = array<i64: 352, 352>}, {pipeline_mode = #tpu.pipeline_mode<synchronous>, transform_indices = @transform_1, window_bounds = array<i64: 352, 196>}, {transform_indices = @transform_2, window_bounds = array<i64: 352, 2>}, {transform_indices = @transform_3, window_bounds = array<i64: 352, 196>}]} {
    %c0 = arith.constant 0 : index
    %c0_0 = arith.constant 0 : index
    %0 = vector.load %arg1[%c0, %c0_0] : memref<352x352xf32, #tpu.memory_space<vmem>>, vector<352x352xf32>
    %1 = arith.truncf %0 : vector<352x352xf32> to vector<352x352xbf16>
    %c0_1 = arith.constant 0 : index
    %c0_2 = arith.constant 0 : index
    %2 = vector.load %arg2[%c0_1, %c0_2] : memref<352x196xf32, #tpu.memory_space<vmem>>, vector<352x196xf32>
    %3 = arith.truncf %2 : vector<352x196xf32> to vector<352x196xbf16>
    %cst = arith.constant dense<0.000000e+00> : vector<352x196xf32>
    %4 = tpu.matmul %1, %3, %cst {dimension_numbers = #tpu.dot_dimension_numbers<[1], [0], [0], [1], [0, 0, 1, 1], [], []>} : vector<352x352xbf16>, vector<352x196xbf16>, vector<352x196xf32> -> vector<352x196xf32>
    %c0_3 = arith.constant 0 : index
    %c0_4 = arith.constant 0 : index
    %5 = vector.load %arg4[%c0_3, %c0_4] : memref<352x196xf32, #tpu.memory_space<vmem>>, vector<352x196xf32>
    tpu.vector_store %arg4[%c0_3, %c0_4], %4 {strides = array<i32>} : memref<352x196xf32, #tpu.memory_space<vmem>>, vector<352x196xf32>,
    %c0_5 = arith.constant 0 : index
    %c0_6 = arith.constant 0 : index
    %6 = vector.load %arg4[%c0_5, %c0_6] : memref<352x196xf32, #tpu.memory_space<vmem>>, vector<352x196xf32>
    %cst_7 = arith.constant dense<0.000000e+00> : vector<352xf32>
    %7 = vector.multi_reduction <add>, %6, %cst_7 [1] : vector<352x196xf32> to vector<352xf32>
    %8 = vector.shape_cast %7 : vector<352xf32> to vector<352x1xf32>
    %c0_8 = arith.constant 0 : index
    %c0_9 = arith.constant 0 : index
    %9 = vector.load %arg4[%c0_8, %c0_9] : memref<352x196xf32, #tpu.memory_space<vmem>>, vector<352x196xf32>
    %c0_10 = arith.constant 0 : index
    %c0_11 = arith.constant 0 : index
    %10 = vector.load %arg4[%c0_10, %c0_11] : memref<352x196xf32, #tpu.memory_space<vmem>>, vector<352x196xf32>
    %11 = arith.mulf %9, %10 : vector<352x196xf32>
    %cst_12 = arith.constant dense<0.000000e+00> : vector<352xf32>
    %12 = vector.multi_reduction <add>, %11, %cst_12 [1] : vector<352x196xf32> to vector<352xf32>
    %13 = vector.shape_cast %12 : vector<352xf32> to vector<352x1xf32>
    %cst_13 = arith.constant 0.00510204071 : f32
    %14 = vector.broadcast %cst_13 : f32 to vector<352x1xf32>
    %15 = arith.mulf %8, %14 : vector<352x1xf32>
    %cst_14 = arith.constant 0.00510204071 : f32
    %16 = vector.broadcast %cst_14 : f32 to vector<352x1xf32>
    %17 = arith.mulf %13, %16 : vector<352x1xf32>
    %18 = arith.mulf %15, %15 : vector<352x1xf32>
    %19 = arith.subf %17, %18 : vector<352x1xf32>
    %cst_15 = arith.constant 0.000000e+00 : f32
    %20 = vector.broadcast %cst_15 : f32 to vector<352x1xf32>
    %21 = arith.maximumf %19, %20 : vector<352x1xf32>
    %c0_16 = arith.constant 0 : index
    %c0_17 = arith.constant 0 : index
    %22 = vector.load %arg3[%c0_16, %c0_17] : memref<352x2xf32, #tpu.memory_space<vmem>>, vector<352x1xf32>
    %c0_18 = arith.constant 0 : index
    %c1 = arith.constant 1 : index
    %23 = vector.load %arg3[%c0_18, %c1] : memref<352x2xf32, #tpu.memory_space<vmem>>, vector<352x1xf32>
    %cst_19 = arith.constant 9.99999974E-6 : f32
    %24 = vector.broadcast %cst_19 : f32 to vector<352x1xf32>
    %25 = arith.addf %21, %24 : vector<352x1xf32>
    %26 = math.rsqrt %25 : vector<352x1xf32>
    %27 = arith.mulf %22, %26 : vector<352x1xf32>
    %28 = arith.mulf %15, %27 : vector<352x1xf32>
    %29 = arith.subf %23, %28 : vector<352x1xf32>
    %c0_20 = arith.constant 0 : index
    %c0_21 = arith.constant 0 : index
    %30 = vector.load %arg4[%c0_20, %c0_21] : memref<352x196xf32, #tpu.memory_space<vmem>>, vector<352x196xf32>
    %31 = vector.broadcast %27 : vector<352x1xf32> to vector<352x196xf32>
    %32 = arith.mulf %30, %31 : vector<352x196xf32>
    %33 = vector.broadcast %29 : vector<352x1xf32> to vector<352x196xf32>
    %34 = arith.addf %32, %33 : vector<352x196xf32>
    %c0_22 = arith.constant 0 : index
    %c0_23 = arith.constant 0 : index
    %35 = vector.load %arg4[%c0_22, %c0_23] : memref<352x196xf32, #tpu.memory_space<vmem>>, vector<352x196xf32>
    tpu.vector_store %arg4[%c0_22, %c0_23], %34 {strides = array<i32>} : memref<352x196xf32, #tpu.memory_space<vmem>>, vector<352x196xf32>,
    return
  }
  func.func @transform_0(%arg0: i32) -> (i32, i32) {
    %c0_i32 = arith.constant 0 : i32
    %c0_i32_0 = arith.constant 0 : i32
    return %arg0, %c0_i32 : i32, i32
  }
  func.func @transform_1(%arg0: i32) -> (i32, i32) {
    %c0_i32 = arith.constant 0 : i32
    %c0_i32_0 = arith.constant 0 : i32
    %c0_i32_1 = arith.constant 0 : i32
    return %c0_i32, %c0_i32_0 : i32, i32
  }
  func.func @transform_2(%arg0: i32) -> (i32, i32) {
    %c0_i32 = arith.constant 0 : i32
    %c0_i32_0 = arith.constant 0 : i32
    return %arg0, %c0_i32 : i32, i32
  }
  func.func @transform_3(%arg0: i32) -> (i32, i32) {
    %c0_i32 = arith.constant 0 : i32
    %c0_i32_0 = arith.constant 0 : i32
    return %arg0, %c0_i32 : i32, i32
  }
}

</mosaic_0001>

<llo_original>
// kernel: tpu_custom_call.1
$region0: #{tpu_custom_call.1}
  #allocation0 [shape = 'u32[]', space=smem, size = 0x4, offset = 0x4, fixed_abs, tag = 'smem constant byte address 0x4 - core index']
  #allocation1 [shape = 'u32[144,128]{1,0:T(1,128)}', space=vmem, size = 0x12000, scoped, tag = 'internal scratch']
  %s0 = inlined_call_operand.vmem [shape: f32[352,352], index: 0, kind: input, shape index: {}]
  %s1 = inlined_call_operand.vmem [shape: f32[352,196], index: 1, kind: input, shape index: {}]
  %s2 = inlined_call_operand.vmem [shape: f32[352,2], index: 2, kind: input, shape index: {}]
  %s3 = inlined_call_operand.vmem [shape: f32[352,196], index: 3, kind: output, shape index: {}]
  %s4 = sld [smem:[#allocation0]]
  $region22: #{tpu_custom_call.1} parent=0
    _
  %s6 = ssub.s32 1, %s4
  %s7 = scalar_select 0, %s6, %s4
  // Predicated region
  $region2: #{tpu_custom_call.1} parent=0 // pred_check
    _
  $region3: #{tpu_custom_call.1} parent=0 // pred_check_branch
    %9 = sbr.rel (0) target = $region5
  $region4: #{tpu_custom_call.1} parent=0 // pred_region
    _
  $region5: #{tpu_custom_call.1} parent=0 // pred_fallthru
    _
  // Predicated region
  $region6: #{tpu_custom_call.1} parent=0 // pred_check
    _
  $region7: #{tpu_custom_call.1} parent=0 // pred_check_branch
    %11 = sbr.rel (0) target = $region9
  $region8: #{tpu_custom_call.1} parent=0 // pred_region
    _
  $region9: #{tpu_custom_call.1} parent=0 // pred_fallthru
    _
  // Predicated region
  $region10: #{tpu_custom_call.1} parent=0 // pred_check
    _
  $region11: #{tpu_custom_call.1} parent=0 // pred_check_branch
    %13 = sbr.rel (0) target = $region13
  $region12: #{tpu_custom_call.1} parent=0 // pred_region
    _
  $region13: #{tpu_custom_call.1} parent=0 // pred_fallthru
    _
  %v15 = vld [vmem:[%s0] sm:$0xff]
  %v16 = vld [vmem:[%s0 + $0x8] sm:$0xff]
  %v17 = vld [vmem:[%s0 + $0x10] sm:$0xff]
  %v18 = vld [vmem:[%s0 + $0x18] sm:$0xff]
  %v19 = vld [vmem:[%s0 + $0x20] sm:$0xff]
  %v20 = vld [vmem:[%s0 + $0x28] sm:$0xff]
  %v21 = vld [vmem:[%s0 + $0x30] sm:$0xff]
  %v22 = vld [vmem:[%s0 + $0x38] sm:$0xff]
  %v23 = vld [vmem:[%s0 + $0x40] sm:$0xff]
  %v24 = vld [vmem:[%s0 + $0x48] sm:$0xff]
  %v25 = vld [vmem:[%s0 + $0x50] sm:$0xff]
  %v26 = vld [vmem:[%s0 + $0x58] sm:$0xff]
  %v27 = vld [vmem:[%s0 + $0x60] sm:$0xff]
  %v28 = vld [vmem:[%s0 + $0x68] sm:$0xff]
  %v29 = vld [vmem:[%s0 + $0x70] sm:$0xff]
  %v30 = vld [vmem:[%s0 + $0x78] sm:$0xff]
  %v31 = vld [vmem:[%s0 + $0x80] sm:$0xff]
  %v32 = vld [vmem:[%s0 + $0x88] sm:$0xff]
  %v33 = vld [vmem:[%s0 + $0x90] sm:$0xff]
  %v34 = vld [vmem:[%s0 + $0x98] sm:$0xff]
  %v35 = vld [vmem:[%s0 + $0xa0] sm:$0xff]
  %v36 = vld [vmem:[%s0 + $0xa8] sm:$0xff]
  %v37 = vld [vmem:[%s0 + $0xb0] sm:$0xff]
  %v38 = vld [vmem:[%s0 + $0xb8] sm:$0xff]
  %v39 = vld [vmem:[%s0 + $0xc0] sm:$0xff]
  %v40 = vld [vmem:[%s0 + $0xc8] sm:$0xff]
  %v41 = vld [vmem:[%s0 + $0xd0] sm:$0xff]
  %v42 = vld [vmem:[%s0 + $0xd8] sm:$0xff]
  %v43 = vld [vmem:[%s0 + $0xe0] sm:$0xff]
  %v44 = vld [vmem:[%s0 + $0xe8] sm:$0xff]
  %v45 = vld [vmem:[%s0 + $0xf0] sm:$0xff]
  %v46 = vld [vmem:[%s0 + $0xf8] sm:$0xff]
  %v47 = vld [vmem:[%s0 + $0x100] sm:$0xff]
  %v48 = vld [vmem:[%s0 + $0x108] sm:$0xff]
  %v49 = vld [vmem:[%s0 + $0x110] sm:$0xff]
  %v50 = vld [vmem:[%s0 + $0x118] sm:$0xff]
  %v51 = vld [vmem:[%s0 + $0x120] sm:$0xff]
  %v52 = vld [vmem:[%s0 + $0x128] sm:$0xff]
  %v53 = vld [vmem:[%s0 + $0x130] sm:$0xff]
  %v54 = vld [vmem:[%s0 + $0x138] sm:$0xff]
  %v55 = vld [vmem:[%s0 + $0x140] sm:$0xff]
  %v56 = vld [vmem:[%s0 + $0x148] sm:$0xff]
  %v57 = vld [vmem:[%s0 + $0x150] sm:$0xff]
  %v58 = vld [vmem:[%s0 + $0x158] sm:$0xff]
  %v59 = vld [vmem:[%s0 + $0x160] sm:$0xff]
  %v60 = vld [vmem:[%s0 + $0x168] sm:$0xff]
  %v61 = vld [vmem:[%s0 + $0x170] sm:$0xff]
  %v62 = vld [vmem:[%s0 + $0x178] sm:$0xff]
  %v63 = vld [vmem:[%s0 + $0x180] sm:$0xff]
  %v64 = vld [vmem:[%s0 + $0x188] sm:$0xff]
  %v65 = vld [vmem:[%s0 + $0x190] sm:$0xff]
  %v66 = vld [vmem:[%s0 + $0x198] sm:$0xff]
  %v67 = vld [vmem:[%s0 + $0x1a0] sm:$0xff]
  %v68 = vld [vmem:[%s0 + $0x1a8] sm:$0xff]
  %v69 = vld [vmem:[%s0 + $0x1b0] sm:$0xff]
  %v70 = vld [vmem:[%s0 + $0x1b8] sm:$0xff]
  %v71 = vld [vmem:[%s0 + $0x1c0] sm:$0xff]
  %v72 = vld [vmem:[%s0 + $0x1c8] sm:$0xff]
  %v73 = vld [vmem:[%s0 + $0x1d0] sm:$0xff]
  %v74 = vld [vmem:[%s0 + $0x1d8] sm:$0xff]
  %v75 = vld [vmem:[%s0 + $0x1e0] sm:$0xff]
  %v76 = vld [vmem:[%s0 + $0x1e8] sm:$0xff]
  %v77 = vld [vmem:[%s0 + $0x1f0] sm:$0xff]
  %v78 = vld [vmem:[%s0 + $0x1f8] sm:$0xff]
  %v79 = vld [vmem:[%s0 + $0x200] sm:$0xff]
  %v80 = vld [vmem:[%s0 + $0x208] sm:$0xff]
  %v81 = vld [vmem:[%s0 + $0x210] sm:$0xff]
  %v82 = vld [vmem:[%s0 + $0x218] sm:$0xff]
  %v83 = vld [vmem:[%s0 + $0x220] sm:$0xff]
  %v84 = vld [vmem:[%s0 + $0x228] sm:$0xff]
  %v85 = vld [vmem:[%s0 + $0x230] sm:$0xff]
  %v86 = vld [vmem:[%s0 + $0x238] sm:$0xff]
  %v87 = vld [vmem:[%s0 + $0x240] sm:$0xff]
  %v88 = vld [vmem:[%s0 + $0x248] sm:$0xff]
  %v89 = vld [vmem:[%s0 + $0x250] sm:$0xff]
  %v90 = vld [vmem:[%s0 + $0x258] sm:$0xff]
  %v91 = vld [vmem:[%s0 + $0x260] sm:$0xff]
  %v92 = vld [vmem:[%s0 + $0x268] sm:$0xff]
  %v93 = vld [vmem:[%s0 + $0x270] sm:$0xff]
  %v94 = vld [vmem:[%s0 + $0x278] sm:$0xff]
  %v95 = vld [vmem:[%s0 + $0x280] sm:$0xff]
  %v96 = vld [vmem:[%s0 + $0x288] sm:$0xff]
  %v97 = vld [vmem:[%s0 + $0x290] sm:$0xff]
  %v98 = vld [vmem:[%s0 + $0x298] sm:$0xff]
  %v99 = vld [vmem:[%s0 + $0x2a0] sm:$0xff]
  %v100 = vld [vmem:[%s0 + $0x2a8] sm:$0xff]
  %v101 = vld [vmem:[%s0 + $0x2b0] sm:$0xff]
  %v102 = vld [vmem:[%s0 + $0x2b8] sm:$0xff]
  %v103 = vld [vmem:[%s0 + $0x2c0] sm:$0xff]
  %v104 = vld [vmem:[%s0 + $0x2c8] sm:$0xff]
  %v105 = vld [vmem:[%s0 + $0x2d0] sm:$0xff]
  %v106 = vld [vmem:[%s0 + $0x2d8] sm:$0xff]
  %v107 = vld [vmem:[%s0 + $0x2e0] sm:$0xff]
  %v108 = vld [vmem:[%s0 + $0x2e8] sm:$0xff]
  %v109 = vld [vmem:[%s0 + $0x2f0] sm:$0xff]
  %v110 = vld [vmem:[%s0 + $0x2f8] sm:$0xff]
  %v111 = vld [vmem:[%s0 + $0x300] sm:$0xff]
  %v112 = vld [vmem:[%s0 + $0x308] sm:$0xff]
  %v113 = vld [vmem:[%s0 + $0x310] sm:$0xff]
  %v114 = vld [vmem:[%s0 + $0x318] sm:$0xff]
  %v115 = vld [vmem:[%s0 + $0x320] sm:$0xff]
  %v116 = vld [vmem:[%s0 + $0x328] sm:$0xff]
  %v117 = vld [vmem:[%s0 + $0x330] sm:$0xff]
  %v118 = vld [vmem:[%s0 + $0x338] sm:$0xff]
  %v119 = vld [vmem:[%s0 + $0x340] sm:$0xff]
  %v120 = vld [vmem:[%s0 + $0x348] sm:$0xff]
  %v121 = vld [vmem:[%s0 + $0x350] sm:$0xff]
  %v122 = vld [vmem:[%s0 + $0x358] sm:$0xff]
  %v123 = vld [vmem:[%s0 + $0x360] sm:$0xff]
  %v124 = vld [vmem:[%s0 + $0x368] sm:$0xff]
  %v125 = vld [vmem:[%s0 + $0x370] sm:$0xff]
  %v126 = vld [vmem:[%s0 + $0x378] sm:$0xff]
  %v127 = vld [vmem:[%s0 + $0x380] sm:$0xff]
  %v128 = vld [vmem:[%s0 + $0x388] sm:$0xff]
  %v129 = vld [vmem:[%s0 + $0x390] sm:$0xff]
  %v130 = vld [vmem:[%s0 + $0x398] sm:$0xff]
  %v131 = vld [vmem:[%s0 + $0x3a0] sm:$0xff]
  %v132 = vld [vmem:[%s0 + $0x3a8] sm:$0xff]
  %v133 = vld [vmem:[%s0 + $0x3b0] sm:$0xff]
  %v134 = vld [vmem:[%s0 + $0x3b8] sm:$0xff]
  %v135 = vld [vmem:[%s0 + $0x3c0] sm:$0xff]
  %v136 = vld [vmem:[%s0 + $0x3c8] sm:$0xff]
  %v137 = vld [vmem:[%s0 + $0x3d0] sm:$0xff]
  %v138 = vld [vmem:[%s0 + $0x3d8] sm:$0xff]
  %v139 = vld [vmem:[%s0 + $0x3e0] sm:$0xff]
  %v140 = vld [vmem:[%s0 + $0x3e8] sm:$0xff]
  %v141 = vld [vmem:[%s0 + $0x3f0] sm:$0xff]
  %v142 = vld [vmem:[%s0 + $0x3f8] sm:$0xff]
  %v143 = vld [vmem:[%s0 + $0x400] sm:$0xff]
  %v144 = vld [vmem:[%s0 + $0x408] sm:$0xff]
  %v145 = vld [vmem:[%s0 + $0x410] sm:$0xff]
  %v146 = vld [vmem:[%s0 + $0x418] sm:$0xff]
  %v147 = vpack.c.bf16 %v18, %v15
  %v148 = vpack.c.bf16 %v19, %v16
  %v149 = vpack.c.bf16 %v20, %v17
  %v150 = vpack.c.bf16 %v24, %v21
  %v151 = vpack.c.bf16 %v25, %v22
  %v152 = vpack.c.bf16 %v26, %v23
  %v153 = vpack.c.bf16 %v30, %v27
  %v154 = vpack.c.bf16 %v31, %v28
  %v155 = vpack.c.bf16 %v32, %v29
  %v156 = vpack.c.bf16 %v36, %v33
  %v157 = vpack.c.bf16 %v37, %v34
  %v158 = vpack.c.bf16 %v38, %v35
  %v159 = vpack.c.bf16 %v42, %v39
  %v160 = vpack.c.bf16 %v43, %v40
  %v161 = vpack.c.bf16 %v44, %v41
  %v162 = vpack.c.bf16 %v48, %v45
  %v163 = vpack.c.bf16 %v49, %v46
  %v164 = vpack.c.bf16 %v50, %v47
  %v165 = vpack.c.bf16 %v54, %v51
  %v166 = vpack.c.bf16 %v55, %v52
  %v167 = vpack.c.bf16 %v56, %v53
  %v168 = vpack.c.bf16 %v60, %v57
  %v169 = vpack.c.bf16 %v61, %v58
  %v170 = vpack.c.bf16 %v62, %v59
  %v171 = vpack.c.bf16 %v66, %v63
  %v172 = vpack.c.bf16 %v67, %v64
  %v173 = vpack.c.bf16 %v68, %v65
  %v174 = vpack.c.bf16 %v72, %v69
  %v175 = vpack.c.bf16 %v73, %v70
  %v176 = vpack.c.bf16 %v74, %v71
  %v177 = vpack.c.bf16 %v78, %v75
  %v178 = vpack.c.bf16 %v79, %v76
  %v179 = vpack.c.bf16 %v80, %v77
  %v180 = vpack.c.bf16 %v84, %v81
  %v181 = vpack.c.bf16 %v85, %v82
  %v182 = vpack.c.bf16 %v86, %v83
  %v183 = vpack.c.bf16 %v90, %v87
  %v184 = vpack.c.bf16 %v91, %v88
  %v185 = vpack.c.bf16 %v92, %v89
  %v186 = vpack.c.bf16 %v96, %v93
  %v187 = vpack.c.bf16 %v97, %v94
  %v188 = vpack.c.bf16 %v98, %v95
  %v189 = vpack.c.bf16 %v102, %v99
  %v190 = vpack.c.bf16 %v103, %v100
  %v191 = vpack.c.bf16 %v104, %v101
  %v192 = vpack.c.bf16 %v108, %v105
  %v193 = vpack.c.bf16 %v109, %v106
  %v194 = vpack.c.bf16 %v110, %v107
  %v195 = vpack.c.bf16 %v114, %v111
  %v196 = vpack.c.bf16 %v115, %v112
  %v197 = vpack.c.bf16 %v116, %v113
  %v198 = vpack.c.bf16 %v120, %v117
  %v199 = vpack.c.bf16 %v121, %v118
  %v200 = vpack.c.bf16 %v122, %v119
  %v201 = vpack.c.bf16 %v126, %v123
  %v202 = vpack.c.bf16 %v127, %v124
  %v203 = vpack.c.bf16 %v128, %v125
  %v204 = vpack.c.bf16 %v132, %v129
  %v205 = vpack.c.bf16 %v133, %v130
  %v206 = vpack.c.bf16 %v134, %v131
  %v207 = vpack.c.bf16 %v138, %v135
  %v208 = vpack.c.bf16 %v139, %v136
  %v209 = vpack.c.bf16 %v140, %v137
  %v210 = vpack.c.bf16 %v144, %v141
  %v211 = vpack.c.bf16 %v145, %v142
  %v212 = vpack.c.bf16 %v146, %v143
  %v213 = vld [vmem:[%s1] sm:$0xff]
  %v214 = vld [vmem:[%s1 + $0x8] sm:$0xff]
  %v215 = vld [vmem:[%s1 + $0x10] sm:$0xff]
  %v216 = vld [vmem:[%s1 + $0x18] sm:$0xff]
  %v217 = vld [vmem:[%s1 + $0x20] sm:$0xff]
  %v218 = vld [vmem:[%s1 + $0x28] sm:$0xff]
  %v219 = vld [vmem:[%s1 + $0x30] sm:$0xff]
  %v220 = vld [vmem:[%s1 + $0x38] sm:$0xff]
  %v221 = vld [vmem:[%s1 + $0x40] sm:$0xff]
  %v222 = vld [vmem:[%s1 + $0x48] sm:$0xff]
  %v223 = vld [vmem:[%s1 + $0x50] sm:$0xff]
  %v224 = vld [vmem:[%s1 + $0x58] sm:$0xff]
  %v225 = vld [vmem:[%s1 + $0x60] sm:$0xff]
  %v226 = vld [vmem:[%s1 + $0x68] sm:$0xff]
  %v227 = vld [vmem:[%s1 + $0x70] sm:$0xff]
  %v228 = vld [vmem:[%s1 + $0x78] sm:$0xff]
  %v229 = vld [vmem:[%s1 + $0x80] sm:$0xff]
  %v230 = vld [vmem:[%s1 + $0x88] sm:$0xff]
  %v231 = vld [vmem:[%s1 + $0x90] sm:$0xff]
  %v232 = vld [vmem:[%s1 + $0x98] sm:$0xff]
  %v233 = vld [vmem:[%s1 + $0xa0] sm:$0xff]
  %v234 = vld [vmem:[%s1 + $0xa8] sm:$0xff]
  %v235 = vld [vmem:[%s1 + $0xb0] sm:$0xff]
  %v236 = vld [vmem:[%s1 + $0xb8] sm:$0xff]
  %v237 = vld [vmem:[%s1 + $0xc0] sm:$0xff]
  %v238 = vld [vmem:[%s1 + $0xc8] sm:$0xff]
  %v239 = vld [vmem:[%s1 + $0xd0] sm:$0xff]
  %v240 = vld [vmem:[%s1 + $0xd8] sm:$0xff]
  %v241 = vld [vmem:[%s1 + $0xe0] sm:$0xff]
  %v242 = vld [vmem:[%s1 + $0xe8] sm:$0xff]
  %v243 = vld [vmem:[%s1 + $0xf0] sm:$0xff]
  %v244 = vld [vmem:[%s1 + $0xf8] sm:$0xff]
  %v245 = vld [vmem:[%s1 + $0x100] sm:$0xff]
  %v246 = vld [vmem:[%s1 + $0x108] sm:$0xff]
  %v247 = vld [vmem:[%s1 + $0x110] sm:$0xff]
  %v248 = vld [vmem:[%s1 + $0x118] sm:$0xff]
  %v249 = vld [vmem:[%s1 + $0x120] sm:$0xff]
  %v250 = vld [vmem:[%s1 + $0x128] sm:$0xff]
  %v251 = vld [vmem:[%s1 + $0x130] sm:$0xff]
  %v252 = vld [vmem:[%s1 + $0x138] sm:$0xff]
  %v253 = vld [vmem:[%s1 + $0x140] sm:$0xff]
  %v254 = vld [vmem:[%s1 + $0x148] sm:$0xff]
  %v255 = vld [vmem:[%s1 + $0x150] sm:$0xff]
  %v256 = vld [vmem:[%s1 + $0x158] sm:$0xff]
  %v257 = vld [vmem:[%s1 + $0x160] sm:$0xff]
  %v258 = vld [vmem:[%s1 + $0x168] sm:$0xff]
  %v259 = vld [vmem:[%s1 + $0x170] sm:$0xff]
  %v260 = vld [vmem:[%s1 + $0x178] sm:$0xff]
  %v261 = vld [vmem:[%s1 + $0x180] sm:$0xff]
  %v262 = vld [vmem:[%s1 + $0x188] sm:$0xff]
  %v263 = vld [vmem:[%s1 + $0x190] sm:$0xff]
  %v264 = vld [vmem:[%s1 + $0x198] sm:$0xff]
  %v265 = vld [vmem:[%s1 + $0x1a0] sm:$0xff]
  %v266 = vld [vmem:[%s1 + $0x1a8] sm:$0xff]
  %v267 = vld [vmem:[%s1 + $0x1b0] sm:$0xff]
  %v268 = vld [vmem:[%s1 + $0x1b8] sm:$0xff]
  %v269 = vld [vmem:[%s1 + $0x1c0] sm:$0xff]
  %v270 = vld [vmem:[%s1 + $0x1c8] sm:$0xff]
  %v271 = vld [vmem:[%s1 + $0x1d0] sm:$0xff]
  %v272 = vld [vmem:[%s1 + $0x1d8] sm:$0xff]
  %v273 = vld [vmem:[%s1 + $0x1e0] sm:$0xff]
  %v274 = vld [vmem:[%s1 + $0x1e8] sm:$0xff]
  %v275 = vld [vmem:[%s1 + $0x1f0] sm:$0xff]
  %v276 = vld [vmem:[%s1 + $0x1f8] sm:$0xff]
  %v277 = vld [vmem:[%s1 + $0x200] sm:$0xff]
  %v278 = vld [vmem:[%s1 + $0x208] sm:$0xff]
  %v279 = vld [vmem:[%s1 + $0x210] sm:$0xff]
  %v280 = vld [vmem:[%s1 + $0x218] sm:$0xff]
  %v281 = vld [vmem:[%s1 + $0x220] sm:$0xff]
  %v282 = vld [vmem:[%s1 + $0x228] sm:$0xff]
  %v283 = vld [vmem:[%s1 + $0x230] sm:$0xff]
  %v284 = vld [vmem:[%s1 + $0x238] sm:$0xff]
  %v285 = vld [vmem:[%s1 + $0x240] sm:$0xff]
  %v286 = vld [vmem:[%s1 + $0x248] sm:$0xff]
  %v287 = vld [vmem:[%s1 + $0x250] sm:$0xff]
  %v288 = vld [vmem:[%s1 + $0x258] sm:$0xff]
  %v289 = vld [vmem:[%s1 + $0x260] sm:$0xff]
  %v290 = vld [vmem:[%s1 + $0x268] sm:$0xff]
  %v291 = vld [vmem:[%s1 + $0x270] sm:$0xff]
  %v292 = vld [vmem:[%s1 + $0x278] sm:$0xff]
  %v293 = vld [vmem:[%s1 + $0x280] sm:$0xff]
  %v294 = vld [vmem:[%s1 + $0x288] sm:$0xff]
  %v295 = vld [vmem:[%s1 + $0x290] sm:$0xff]
  %v296 = vld [vmem:[%s1 + $0x298] sm:$0xff]
  %v297 = vld [vmem:[%s1 + $0x2a0] sm:$0xff]
  %v298 = vld [vmem:[%s1 + $0x2a8] sm:$0xff]
  %v299 = vld [vmem:[%s1 + $0x2b0] sm:$0xff]
  %v300 = vld [vmem:[%s1 + $0x2b8] sm:$0xff]
  %v301 = vpack.c.bf16 %v215, %v213
  %v302 = vpack.c.bf16 %v216, %v214
  %v303 = vpack.c.bf16 %v219, %v217
  %v304 = vpack.c.bf16 %v220, %v218
  %v305 = vpack.c.bf16 %v223, %v221
  %v306 = vpack.c.bf16 %v224, %v222
  %v307 = vpack.c.bf16 %v227, %v225
  %v308 = vpack.c.bf16 %v228, %v226
  %v309 = vpack.c.bf16 %v231, %v229
  %v310 = vpack.c.bf16 %v232, %v230
  %v311 = vpack.c.bf16 %v235, %v233
  %v312 = vpack.c.bf16 %v236, %v234
  %v313 = vpack.c.bf16 %v239, %v237
  %v314 = vpack.c.bf16 %v240, %v238
  %v315 = vpack.c.bf16 %v243, %v241
  %v316 = vpack.c.bf16 %v244, %v242
  %v317 = vpack.c.bf16 %v247, %v245
  %v318 = vpack.c.bf16 %v248, %v246
  %v319 = vpack.c.bf16 %v251, %v249
  %v320 = vpack.c.bf16 %v252, %v250
  %v321 = vpack.c.bf16 %v255, %v253
  %v322 = vpack.c.bf16 %v256, %v254
  %v323 = vpack.c.bf16 %v259, %v257
  %v324 = vpack.c.bf16 %v260, %v258
  %v325 = vpack.c.bf16 %v263, %v261
  %v326 = vpack.c.bf16 %v264, %v262
  %v327 = vpack.c.bf16 %v267, %v265
  %v328 = vpack.c.bf16 %v268, %v266
  %v329 = vpack.c.bf16 %v271, %v269
  %v330 = vpack.c.bf16 %v272, %v270
  %v331 = vpack.c.bf16 %v275, %v273
  %v332 = vpack.c.bf16 %v276, %v274
  %v333 = vpack.c.bf16 %v279, %v277
  %v334 = vpack.c.bf16 %v280, %v278
  %v335 = vpack.c.bf16 %v283, %v281
  %v336 = vpack.c.bf16 %v284, %v282
  %v337 = vpack.c.bf16 %v287, %v285
  %v338 = vpack.c.bf16 %v288, %v286
  %v339 = vpack.c.bf16 %v291, %v289
  %v340 = vpack.c.bf16 %v292, %v290
  %v341 = vpack.c.bf16 %v295, %v293
  %v342 = vpack.c.bf16 %v296, %v294
  %v343 = vpack.c.bf16 %v299, %v297
  %v344 = vpack.c.bf16 %v300, %v298
  %vm345 = vcmask 785408
  %v347 = vsel %vm345, %v149, 0
  %v350 = vsel %vm345, %v152, 0
  %v353 = vsel %vm345, %v155, 0
  %v356 = vsel %vm345, %v158, 0
  %v359 = vsel %vm345, %v161, 0
  %v362 = vsel %vm345, %v164, 0
  %v365 = vsel %vm345, %v167, 0
  %v368 = vsel %vm345, %v170, 0
  %v371 = vsel %vm345, %v173, 0
  %v374 = vsel %vm345, %v176, 0
  %v377 = vsel %vm345, %v179, 0
  %v380 = vsel %vm345, %v182, 0
  %v383 = vsel %vm345, %v185, 0
  %v386 = vsel %vm345, %v188, 0
  %v389 = vsel %vm345, %v191, 0
  %v392 = vsel %vm345, %v194, 0
  %v395 = vsel %vm345, %v197, 0
  %v398 = vsel %vm345, %v200, 0
  %v401 = vsel %vm345, %v203, 0
  %v404 = vsel %vm345, %v206, 0
  %v407 = vsel %vm345, %v209, 0
  %v410 = vsel %vm345, %v212, 0
  %412 = vmatprep.subr.bf16.mxu0 %v302
  %413 = vmatpush1.bf16.msra.mxu0 %v301
  %414 = vmatprep.subr.bf16.mxu0 %v304
  %415 = vmatpush1.bf16.msra.mxu0 %v303
  %416 = vmatprep.subr.bf16.mxu0 %v306
  %417 = vmatpush1.bf16.msra.mxu0 %v305
  %418 = vmatprep.subr.bf16.mxu0 %v308
  %419 = vmatpush1.bf16.msra.mxu0 %v307
  %420 = vmatprep.subr.bf16.mxu0 %v310
  %421 = vmatpush1.bf16.msra.mxu0 %v309
  %422 = vmatprep.subr.bf16.mxu0 %v312
  %423 = vmatpush1.bf16.msra.mxu0 %v311
  %424 = vmatprep.subr.bf16.mxu0 %v314
  %425 = vmatpush1.bf16.msra.mxu0 %v313
  %426 = vmatprep.subr.bf16.mxu0 %v316
  %427 = vmatpush1.bf16.msra.mxu0 %v315
  %428 = vmatprep.subr.bf16.mxu0 %v318
  %429 = vmatpush1.bf16.msra.mxu0 %v317
  %430 = vmatprep.subr.bf16.mxu0 %v320
  %431 = vmatpush1.bf16.msra.mxu0 %v319
  %432 = vmatprep.subr.bf16.mxu0 %v322
  %433 = vmatpush1.bf16.msra.mxu0 %v321
  %434 = vmatprep.subr.bf16.mxu0 %v324
  %435 = vmatpush1.bf16.msra.mxu0 %v323
  %436 = vmatprep.subr.bf16.mxu0 %v326
  %437 = vmatpush1.bf16.msra.mxu0 %v325
  %438 = vmatprep.subr.bf16.mxu0 %v328
  %439 = vmatpush1.bf16.msra.mxu0 %v327
  %440 = vmatprep.subr.bf16.mxu0 %v330
  %441 = vmatpush1.bf16.msra.mxu0 %v329
  %442 = vmatprep.subr.bf16.mxu0 %v332
  %443 = vmatpush1.bf16.msra.mxu0 %v331
  %444 = vmatprep.mubr.bf16.mxu0 %v148
  %445 = vmatmul.mubr.bf16.gmra.mrb[0].mxu0 %v147
  %v446 = vpop.f32.mrb[0].mxu0
  %v447 = vadd.f32 0.0, %v446
  %v448 = vpop.f32.mrb[0].mxu0
  %v449 = vadd.f32 0.0, %v448
  %v450 = vpop.f32.mrb[0].mxu0
  %v451 = vadd.f32 0.0, %v450
  %v452 = vpop.f32.mrb[0].mxu0
  %v453 = vadd.f32 0.0, %v452
  %454 = vmatprep.mubr.bf16.mxu0 %v151
  %455 = vmatmul.mubr.bf16.gmra.mrb[0].mxu0 %v150
  %v456 = vpop.f32.mrb[0].mxu0
  %v457 = vadd.f32 0.0, %v456
  %v458 = vpop.f32.mrb[0].mxu0
  %v459 = vadd.f32 0.0, %v458
  %v460 = vpop.f32.mrb[0].mxu0
  %v461 = vadd.f32 0.0, %v460
  %v462 = vpop.f32.mrb[0].mxu0
  %v463 = vadd.f32 0.0, %v462
  %464 = vmatprep.mubr.bf16.mxu0 %v154
  %465 = vmatmul.mubr.bf16.gmra.mrb[0].mxu0 %v153
  %v466 = vpop.f32.mrb[0].mxu0
  %v467 = vadd.f32 0.0, %v466
  %v468 = vpop.f32.mrb[0].mxu0
  %v469 = vadd.f32 0.0, %v468
  %v470 = vpop.f32.mrb[0].mxu0
  %v471 = vadd.f32 0.0, %v470
  %v472 = vpop.f32.mrb[0].mxu0
  %v473 = vadd.f32 0.0, %v472
  %474 = vmatprep.mubr.bf16.mxu0 %v157
  %475 = vmatmul.mubr.bf16.gmra.mrb[0].mxu0 %v156
  %v476 = vpop.f32.mrb[0].mxu0
  %v477 = vadd.f32 0.0, %v476
  %v478 = vpop.f32.mrb[0].mxu0
  %v479 = vadd.f32 0.0, %v478
  %v480 = vpop.f32.mrb[0].mxu0
  %v481 = vadd.f32 0.0, %v480
  %v482 = vpop.f32.mrb[0].mxu0
  %v483 = vadd.f32 0.0, %v482
  %484 = vmatprep.mubr.bf16.mxu0 %v160
  %485 = vmatmul.mubr.bf16.gmra.mrb[0].mxu0 %v159
  %v486 = vpop.f32.mrb[0].mxu0
  %v487 = vadd.f32 0.0, %v486
  %v488 = vpop.f32.mrb[0].mxu0
  %v489 = vadd.f32 0.0, %v488
  %v490 = vpop.f32.mrb[0].mxu0
  %v491 = vadd.f32 0.0, %v490
  %v492 = vpop.f32.mrb[0].mxu0
  %v493 = vadd.f32 0.0, %v492
  %494 = vmatprep.mubr.bf16.mxu0 %v163
  %495 = vmatmul.mubr.bf16.gmra.mrb[0].mxu0 %v162
  %v496 = vpop.f32.mrb[0].mxu0
  %v497 = vadd.f32 0.0, %v496
  %v498 = vpop.f32.mrb[0].mxu0
  %v499 = vadd.f32 0.0, %v498
  %v500 = vpop.f32.mrb[0].mxu0
  %v501 = vadd.f32 0.0, %v500
  %v502 = vpop.f32.mrb[0].mxu0
  %v503 = vadd.f32 0.0, %v502
  %504 = vmatprep.mubr.bf16.mxu0 %v166
  %505 = vmatmul.mubr.bf16.gmra.mrb[0].mxu0 %v165
  %v506 = vpop.f32.mrb[0].mxu0
  %v507 = vadd.f32 0.0, %v506
  %v508 = vpop.f32.mrb[0].mxu0
  %v509 = vadd.f32 0.0, %v508
  %v510 = vpop.f32.mrb[0].mxu0
  %v511 = vadd.f32 0.0, %v510
  %v512 = vpop.f32.mrb[0].mxu0
  %v513 = vadd.f32 0.0, %v512
  %514 = vmatprep.mubr.bf16.mxu0 %v169
  %515 = vmatmul.mubr.bf16.gmra.mrb[0].mxu0 %v168
  %v516 = vpop.f32.mrb[0].mxu0
  %v517 = vadd.f32 0.0, %v516
  %v518 = vpop.f32.mrb[0].mxu0
  %v519 = vadd.f32 0.0, %v518
  %v520 = vpop.f32.mrb[0].mxu0
  %v521 = vadd.f32 0.0, %v520
  %v522 = vpop.f32.mrb[0].mxu0
  %v523 = vadd.f32 0.0, %v522
  %524 = vmatprep.mubr.bf16.mxu0 %v172
  %525 = vmatmul.mubr.bf16.gmra.mrb[0].mxu0 %v171
  %v526 = vpop.f32.mrb[0].mxu0
  %v527 = vadd.f32 0.0, %v526
  %v528 = vpop.f32.mrb[0].mxu0
  %v529 = vadd.f32 0.0, %v528
  %v530 = vpop.f32.mrb[0].mxu0
  %v531 = vadd.f32 0.0, %v530
  %v532 = vpop.f32.mrb[0].mxu0
  %v533 = vadd.f32 0.0, %v532
  %534 = vmatprep.mubr.bf16.mxu0 %v175
  %535 = vmatmul.mubr.bf16.gmra.mrb[0].mxu0 %v174
  %v536 = vpop.f32.mrb[0].mxu0
  %v537 = vadd.f32 0.0, %v536
  %v538 = vpop.f32.mrb[0].mxu0
  %v539 = vadd.f32 0.0, %v538
  %v540 = vpop.f32.mrb[0].mxu0
  %v541 = vadd.f32 0.0, %v540
  %v542 = vpop.f32.mrb[0].mxu0
  %v543 = vadd.f32 0.0, %v542
  %544 = vmatprep.mubr.bf16.mxu0 %v178
  %545 = vmatmul.mubr.bf16.gmra.mrb[0].mxu0 %v177
  %v546 = vpop.f32.mrb[0].mxu0
  %v547 = vadd.f32 0.0, %v546
  %v548 = vpop.f32.mrb[0].mxu0
  %v549 = vadd.f32 0.0, %v548
  %v550 = vpop.f32.mrb[0].mxu0
  %v551 = vadd.f32 0.0, %v550
  %v552 = vpop.f32.mrb[0].mxu0
  %v553 = vadd.f32 0.0, %v552
  %554 = vmatprep.mubr.bf16.mxu0 %v181
  %555 = vmatmul.mubr.bf16.gmra.mrb[0].mxu0 %v180
  %v556 = vpop.f32.mrb[0].mxu0
  %v557 = vadd.f32 0.0, %v556
  %v558 = vpop.f32.mrb[0].mxu0
  %v559 = vadd.f32 0.0, %v558
  %v560 = vpop.f32.mrb[0].mxu0
  %v561 = vadd.f32 0.0, %v560
  %v562 = vpop.f32.mrb[0].mxu0
  %v563 = vadd.f32 0.0, %v562
  %564 = vmatprep.mubr.bf16.mxu0 %v184
  %565 = vmatmul.mubr.bf16.gmra.mrb[0].mxu0 %v183
  %v566 = vpop.f32.mrb[0].mxu0
  %v567 = vadd.f32 0.0, %v566
  %v568 = vpop.f32.mrb[0].mxu0
  %v569 = vadd.f32 0.0, %v568
  %v570 = vpop.f32.mrb[0].mxu0
  %v571 = vadd.f32 0.0, %v570
  %v572 = vpop.f32.mrb[0].mxu0
  %v573 = vadd.f32 0.0, %v572
  %574 = vmatprep.mubr.bf16.mxu0 %v187
  %575 = vmatmul.mubr.bf16.gmra.mrb[0].mxu0 %v186
  %v576 = vpop.f32.mrb[0].mxu0
  %v577 = vadd.f32 0.0, %v576
  %v578 = vpop.f32.mrb[0].mxu0
  %v579 = vadd.f32 0.0, %v578
  %v580 = vpop.f32.mrb[0].mxu0
  %v581 = vadd.f32 0.0, %v580
  %v582 = vpop.f32.mrb[0].mxu0
  %v583 = vadd.f32 0.0, %v582
  %584 = vmatprep.mubr.bf16.mxu0 %v190
  %585 = vmatmul.mubr.bf16.gmra.mrb[0].mxu0 %v189
  %v586 = vpop.f32.mrb[0].mxu0
  %v587 = vadd.f32 0.0, %v586
  %v588 = vpop.f32.mrb[0].mxu0
  %v589 = vadd.f32 0.0, %v588
  %v590 = vpop.f32.mrb[0].mxu0
  %v591 = vadd.f32 0.0, %v590
  %v592 = vpop.f32.mrb[0].mxu0
  %v593 = vadd.f32 0.0, %v592
  %594 = vmatprep.mubr.bf16.mxu0 %v193
  %595 = vmatmul.mubr.bf16.gmra.mrb[0].mxu0 %v192
  %v596 = vpop.f32.mrb[0].mxu0
  %v597 = vadd.f32 0.0, %v596
  %v598 = vpop.f32.mrb[0].mxu0
  %v599 = vadd.f32 0.0, %v598
  %v600 = vpop.f32.mrb[0].mxu0
  %v601 = vadd.f32 0.0, %v600
  %v602 = vpop.f32.mrb[0].mxu0
  %v603 = vadd.f32 0.0, %v602
  %604 = vmatprep.mubr.bf16.mxu0 %v196
  %605 = vmatmul.mubr.bf16.gmra.mrb[0].mxu0 %v195
  %v606 = vpop.f32.mrb[0].mxu0
  %v607 = vadd.f32 0.0, %v606
  %v608 = vpop.f32.mrb[0].mxu0
  %v609 = vadd.f32 0.0, %v608
  %v610 = vpop.f32.mrb[0].mxu0
  %v611 = vadd.f32 0.0, %v610
  %v612 = vpop.f32.mrb[0].mxu0
  %v613 = vadd.f32 0.0, %v612
  %614 = vmatprep.mubr.bf16.mxu0 %v199
  %615 = vmatmul.mubr.bf16.gmra.mrb[0].mxu0 %v198
  %v616 = vpop.f32.mrb[0].mxu0
  %v617 = vadd.f32 0.0, %v616
  %v618 = vpop.f32.mrb[0].mxu0
  %v619 = vadd.f32 0.0, %v618
  %v620 = vpop.f32.mrb[0].mxu0
  %v621 = vadd.f32 0.0, %v620
  %v622 = vpop.f32.mrb[0].mxu0
  %v623 = vadd.f32 0.0, %v622
  %624 = vmatprep.mubr.bf16.mxu0 %v202
  %625 = vmatmul.mubr.bf16.gmra.mrb[0].mxu0 %v201
  %v626 = vpop.f32.mrb[0].mxu0
  %v627 = vadd.f32 0.0, %v626
  %v628 = vpop.f32.mrb[0].mxu0
  %v629 = vadd.f32 0.0, %v628
  %v630 = vpop.f32.mrb[0].mxu0
  %v631 = vadd.f32 0.0, %v630
  %v632 = vpop.f32.mrb[0].mxu0
  %v633 = vadd.f32 0.0, %v632
  %634 = vmatprep.mubr.bf16.mxu0 %v205
  %635 = vmatmul.mubr.bf16.gmra.mrb[0].mxu0 %v204
  %v636 = vpop.f32.mrb[0].mxu0
  %v637 = vadd.f32 0.0, %v636
  %v638 = vpop.f32.mrb[0].mxu0
  %v639 = vadd.f32 0.0, %v638
  %v640 = vpop.f32.mrb[0].mxu0
  %v641 = vadd.f32 0.0, %v640
  %v642 = vpop.f32.mrb[0].mxu0
  %v643 = vadd.f32 0.0, %v642
  %644 = vmatprep.mubr.bf16.mxu0 %v208
  %645 = vmatmul.mubr.bf16.gmra.mrb[0].mxu0 %v207
  %v646 = vpop.f32.mrb[0].mxu0
  %v647 = vadd.f32 0.0, %v646
  %v648 = vpop.f32.mrb[0].mxu0
  %v649 = vadd.f32 0.0, %v648
  %v650 = vpop.f32.mrb[0].mxu0
  %v651 = vadd.f32 0.0, %v650
  %v652 = vpop.f32.mrb[0].mxu0
  %v653 = vadd.f32 0.0, %v652
  %654 = vmatprep.mubr.bf16.mxu0 %v211
  %655 = vmatmul.mubr.bf16.gmra.mrb[0].mxu0 %v210
  %v656 = vpop.f32.mrb[0].mxu0
  %v657 = vadd.f32 0.0, %v656
  %v658 = vpop.f32.mrb[0].mxu0
  %v659 = vadd.f32 0.0, %v658
  %v660 = vpop.f32.mrb[0].mxu0
  %v661 = vadd.f32 0.0, %v660
  %v662 = vpop.f32.mrb[0].mxu0
  %v663 = vadd.f32 0.0, %v662
  %664 = vdwg.mxu0
  %665 = vmatprep.subr.bf16.mxu0 %v334
  %666 = vmatpush1.bf16.msra.mxu0 %v333
  %667 = vmatprep.subr.bf16.mxu0 %v336
  %668 = vmatpush1.bf16.msra.mxu0 %v335
  %669 = vmatprep.subr.bf16.mxu0 %v338
  %670 = vmatpush1.bf16.msra.mxu0 %v337
  %671 = vmatprep.subr.bf16.mxu0 %v340
  %672 = vmatpush1.bf16.msra.mxu0 %v339
  %673 = vmatprep.subr.bf16.mxu0 %v342
  %674 = vmatpush1.bf16.msra.mxu0 %v341
  %675 = vmatprep.subr.bf16.mxu0 %v344
  %676 = vmatpush1.bf16.msra.mxu0 %v343
  %677 = vmatprep.subr.bf16.mxu0 0
  %678 = vmatpush1.bf16.msra.mxu0 0
  %679 = vmatprep.subr.bf16.mxu0 0
  %680 = vmatpush1.bf16.msra.mxu0 0
  %681 = vmatprep.subr.bf16.mxu0 0
  %682 = vmatpush1.bf16.msra.mxu0 0
  %683 = vmatprep.subr.bf16.mxu0 0
  %684 = vmatpush1.bf16.msra.mxu0 0
  %685 = vmatprep.subr.bf16.mxu0 0
  %686 = vmatpush1.bf16.msra.mxu0 0
  %687 = vmatprep.subr.bf16.mxu0 0
  %688 = vmatpush1.bf16.msra.mxu0 0
  %689 = vmatprep.subr.bf16.mxu0 0
  %690 = vmatpush1.bf16.msra.mxu0 0
  %691 = vmatprep.subr.bf16.mxu0 0
  %692 = vmatpush1.bf16.msra.mxu0 0
  %693 = vmatprep.subr.bf16.mxu0 0
  %694 = vmatpush1.bf16.msra.mxu0 0
  %695 = vmatprep.subr.bf16.mxu0 0
  %696 = vmatpush1.bf16.msra.mxu0 0
  %697 = vmatprep.mubr.bf16.mxu0 0
  %698 = vmatmul.mubr.bf16.gmra.mrb[0].mxu0 %v347
  %v699 = vpop.f32.mrb[0].mxu0
  %v700 = vadd.f32 %v447, %v699
  %v701 = vpop.f32.mrb[0].mxu0
  %v702 = vadd.f32 %v449, %v701
  %v703 = vpop.f32.mrb[0].mxu0
  %v704 = vadd.f32 %v451, %v703
  %v705 = vpop.f32.mrb[0].mxu0
  %v706 = vadd.f32 %v453, %v705
  %707 = vmatprep.mubr.bf16.mxu0 0
  %708 = vmatmul.mubr.bf16.gmra.mrb[0].mxu0 %v350
  %v709 = vpop.f32.mrb[0].mxu0
  %v710 = vadd.f32 %v457, %v709
  %v711 = vpop.f32.mrb[0].mxu0
  %v712 = vadd.f32 %v459, %v711
  %v713 = vpop.f32.mrb[0].mxu0
  %v714 = vadd.f32 %v461, %v713
  %v715 = vpop.f32.mrb[0].mxu0
  %v716 = vadd.f32 %v463, %v715
  %717 = vmatprep.mubr.bf16.mxu0 0
  %718 = vmatmul.mubr.bf16.gmra.mrb[0].mxu0 %v353
  %v719 = vpop.f32.mrb[0].mxu0
  %v720 = vadd.f32 %v467, %v719
  %v721 = vpop.f32.mrb[0].mxu0
  %v722 = vadd.f32 %v469, %v721
  %v723 = vpop.f32.mrb[0].mxu0
  %v724 = vadd.f32 %v471, %v723
  %v725 = vpop.f32.mrb[0].mxu0
  %v726 = vadd.f32 %v473, %v725
  %727 = vmatprep.mubr.bf16.mxu0 0
  %728 = vmatmul.mubr.bf16.gmra.mrb[0].mxu0 %v356
  %v729 = vpop.f32.mrb[0].mxu0
  %v730 = vadd.f32 %v477, %v729
  %v731 = vpop.f32.mrb[0].mxu0
  %v732 = vadd.f32 %v479, %v731
  %v733 = vpop.f32.mrb[0].mxu0
  %v734 = vadd.f32 %v481, %v733
  %v735 = vpop.f32.mrb[0].mxu0
  %v736 = vadd.f32 %v483, %v735
  %737 = vmatprep.mubr.bf16.mxu0 0
  %738 = vmatmul.mubr.bf16.gmra.mrb[0].mxu0 %v359
  %v739 = vpop.f32.mrb[0].mxu0
  %v740 = vadd.f32 %v487, %v739
  %v741 = vpop.f32.mrb[0].mxu0
  %v742 = vadd.f32 %v489, %v741
  %v743 = vpop.f32.mrb[0].mxu0
  %v744 = vadd.f32 %v491, %v743
  %v745 = vpop.f32.mrb[0].mxu0
  %v746 = vadd.f32 %v493, %v745
  %747 = vmatprep.mubr.bf16.mxu0 0
  %748 = vmatmul.mubr.bf16.gmra.mrb[0].mxu0 %v362
  %v749 = vpop.f32.mrb[0].mxu0
  %v750 = vadd.f32 %v497, %v749
  %v751 = vpop.f32.mrb[0].mxu0
  %v752 = vadd.f32 %v499, %v751
  %v753 = vpop.f32.mrb[0].mxu0
  %v754 = vadd.f32 %v501, %v753
  %v755 = vpop.f32.mrb[0].mxu0
  %v756 = vadd.f32 %v503, %v755
  %757 = vmatprep.mubr.bf16.mxu0 0
  %758 = vmatmul.mubr.bf16.gmra.mrb[0].mxu0 %v365
  %v759 = vpop.f32.mrb[0].mxu0
  %v760 = vadd.f32 %v507, %v759
  %v761 = vpop.f32.mrb[0].mxu0
  %v762 = vadd.f32 %v509, %v761
  %v763 = vpop.f32.mrb[0].mxu0
  %v764 = vadd.f32 %v511, %v763
  %v765 = vpop.f32.mrb[0].mxu0
  %v766 = vadd.f32 %v513, %v765
  %767 = vmatprep.mubr.bf16.mxu0 0
  %768 = vmatmul.mubr.bf16.gmra.mrb[0].mxu0 %v368
  %v769 = vpop.f32.mrb[0].mxu0
  %v770 = vadd.f32 %v517, %v769
  %v771 = vpop.f32.mrb[0].mxu0
  %v772 = vadd.f32 %v519, %v771
  %v773 = vpop.f32.mrb[0].mxu0
  %v774 = vadd.f32 %v521, %v773
  %v775 = vpop.f32.mrb[0].mxu0
  %v776 = vadd.f32 %v523, %v775
  %777 = vmatprep.mubr.bf16.mxu0 0
  %778 = vmatmul.mubr.bf16.gmra.mrb[0].mxu0 %v371
  %v779 = vpop.f32.mrb[0].mxu0
  %v780 = vadd.f32 %v527, %v779
  %v781 = vpop.f32.mrb[0].mxu0
  %v782 = vadd.f32 %v529, %v781
  %v783 = vpop.f32.mrb[0].mxu0
  %v784 = vadd.f32 %v531, %v783
  %v785 = vpop.f32.mrb[0].mxu0
  %v786 = vadd.f32 %v533, %v785
  %787 = vmatprep.mubr.bf16.mxu0 0
  %788 = vmatmul.mubr.bf16.gmra.mrb[0].mxu0 %v374
  %v789 = vpop.f32.mrb[0].mxu0
  %v790 = vadd.f32 %v537, %v789
  %v791 = vpop.f32.mrb[0].mxu0
  %v792 = vadd.f32 %v539, %v791
  %v793 = vpop.f32.mrb[0].mxu0
  %v794 = vadd.f32 %v541, %v793
  %v795 = vpop.f32.mrb[0].mxu0
  %v796 = vadd.f32 %v543, %v795
  %797 = vmatprep.mubr.bf16.mxu0 0
  %798 = vmatmul.mubr.bf16.gmra.mrb[0].mxu0 %v377
  %v799 = vpop.f32.mrb[0].mxu0
  %v800 = vadd.f32 %v547, %v799
  %v801 = vpop.f32.mrb[0].mxu0
  %v802 = vadd.f32 %v549, %v801
  %v803 = vpop.f32.mrb[0].mxu0
  %v804 = vadd.f32 %v551, %v803
  %v805 = vpop.f32.mrb[0].mxu0
  %v806 = vadd.f32 %v553, %v805
  %807 = vmatprep.mubr.bf16.mxu0 0
  %808 = vmatmul.mubr.bf16.gmra.mrb[0].mxu0 %v380
  %v809 = vpop.f32.mrb[0].mxu0
  %v810 = vadd.f32 %v557, %v809
  %v811 = vpop.f32.mrb[0].mxu0
  %v812 = vadd.f32 %v559, %v811
  %v813 = vpop.f32.mrb[0].mxu0
  %v814 = vadd.f32 %v561, %v813
  %v815 = vpop.f32.mrb[0].mxu0
  %v816 = vadd.f32 %v563, %v815
  %817 = vmatprep.mubr.bf16.mxu0 0
  %818 = vmatmul.mubr.bf16.gmra.mrb[0].mxu0 %v383
  %v819 = vpop.f32.mrb[0].mxu0
  %v820 = vadd.f32 %v567, %v819
  %v821 = vpop.f32.mrb[0].mxu0
  %v822 = vadd.f32 %v569, %v821
  %v823 = vpop.f32.mrb[0].mxu0
  %v824 = vadd.f32 %v571, %v823
  %v825 = vpop.f32.mrb[0].mxu0
  %v826 = vadd.f32 %v573, %v825
  %827 = vmatprep.mubr.bf16.mxu0 0
  %828 = vmatmul.mubr.bf16.gmra.mrb[0].mxu0 %v386
  %v829 = vpop.f32.mrb[0].mxu0
  %v830 = vadd.f32 %v577, %v829
  %v831 = vpop.f32.mrb[0].mxu0
  %v832 = vadd.f32 %v579, %v831
  %v833 = vpop.f32.mrb[0].mxu0
  %v834 = vadd.f32 %v581, %v833
  %v835 = vpop.f32.mrb[0].mxu0
  %v836 = vadd.f32 %v583, %v835
  %837 = vmatprep.mubr.bf16.mxu0 0
  %838 = vmatmul.mubr.bf16.gmra.mrb[0].mxu0 %v389
  %v839 = vpop.f32.mrb[0].mxu0
  %v840 = vadd.f32 %v587, %v839
  %v841 = vpop.f32.mrb[0].mxu0
  %v842 = vadd.f32 %v589, %v841
  %v843 = vpop.f32.mrb[0].mxu0
  %v844 = vadd.f32 %v591, %v843
  %v845 = vpop.f32.mrb[0].mxu0
  %v846 = vadd.f32 %v593, %v845
  %847 = vmatprep.mubr.bf16.mxu0 0
  %848 = vmatmul.mubr.bf16.gmra.mrb[0].mxu0 %v392
  %v849 = vpop.f32.mrb[0].mxu0
  %v850 = vadd.f32 %v597, %v849
  %v851 = vpop.f32.mrb[0].mxu0
  %v852 = vadd.f32 %v599, %v851
  %v853 = vpop.f32.mrb[0].mxu0
  %v854 = vadd.f32 %v601, %v853
  %v855 = vpop.f32.mrb[0].mxu0
  %v856 = vadd.f32 %v603, %v855
  %857 = vmatprep.mubr.bf16.mxu0 0
  %858 = vmatmul.mubr.bf16.gmra.mrb[0].mxu0 %v395
  %v859 = vpop.f32.mrb[0].mxu0
  %v860 = vadd.f32 %v607, %v859
  %v861 = vpop.f32.mrb[0].mxu0
  %v862 = vadd.f32 %v609, %v861
  %v863 = vpop.f32.mrb[0].mxu0
  %v864 = vadd.f32 %v611, %v863
  %v865 = vpop.f32.mrb[0].mxu0
  %v866 = vadd.f32 %v613, %v865
  %867 = vmatprep.mubr.bf16.mxu0 0
  %868 = vmatmul.mubr.bf16.gmra.mrb[0].mxu0 %v398
  %v869 = vpop.f32.mrb[0].mxu0
  %v870 = vadd.f32 %v617, %v869
  %v871 = vpop.f32.mrb[0].mxu0
  %v872 = vadd.f32 %v619, %v871
  %v873 = vpop.f32.mrb[0].mxu0
  %v874 = vadd.f32 %v621, %v873
  %v875 = vpop.f32.mrb[0].mxu0
  %v876 = vadd.f32 %v623, %v875
  %877 = vmatprep.mubr.bf16.mxu0 0
  %878 = vmatmul.mubr.bf16.gmra.mrb[0].mxu0 %v401
  %v879 = vpop.f32.mrb[0].mxu0
  %v880 = vadd.f32 %v627, %v879
  %v881 = vpop.f32.mrb[0].mxu0
  %v882 = vadd.f32 %v629, %v881
  %v883 = vpop.f32.mrb[0].mxu0
  %v884 = vadd.f32 %v631, %v883
  %v885 = vpop.f32.mrb[0].mxu0
  %v886 = vadd.f32 %v633, %v885
  %887 = vmatprep.mubr.bf16.mxu0 0
  %888 = vmatmul.mubr.bf16.gmra.mrb[0].mxu0 %v404
  %v889 = vpop.f32.mrb[0].mxu0
  %v890 = vadd.f32 %v637, %v889
  %v891 = vpop.f32.mrb[0].mxu0
  %v892 = vadd.f32 %v639, %v891
  %v893 = vpop.f32.mrb[0].mxu0
  %v894 = vadd.f32 %v641, %v893
  %v895 = vpop.f32.mrb[0].mxu0
  %v896 = vadd.f32 %v643, %v895
  %897 = vmatprep.mubr.bf16.mxu0 0
  %898 = vmatmul.mubr.bf16.gmra.mrb[0].mxu0 %v407
  %v899 = vpop.f32.mrb[0].mxu0
  %v900 = vadd.f32 %v647, %v899
  %v901 = vpop.f32.mrb[0].mxu0
  %v902 = vadd.f32 %v649, %v901
  %v903 = vpop.f32.mrb[0].mxu0
  %v904 = vadd.f32 %v651, %v903
  %v905 = vpop.f32.mrb[0].mxu0
  %v906 = vadd.f32 %v653, %v905
  %907 = vmatprep.mubr.bf16.mxu0 0
  %908 = vmatmul.mubr.bf16.gmra.mrb[0].mxu0 %v410
  %v909 = vpop.f32.mrb[0].mxu0
  %v910 = vadd.f32 %v657, %v909
  %v911 = vpop.f32.mrb[0].mxu0
  %v912 = vadd.f32 %v659, %v911
  %v913 = vpop.f32.mrb[0].mxu0
  %v914 = vadd.f32 %v661, %v913
  %v915 = vpop.f32.mrb[0].mxu0
  %v916 = vadd.f32 %v663, %v915
  %917 = vdwg.mxu0
  %918 = vst [vmem:[%s3] sm:$0xff] %v700
  %vm919 = vcmask 556032
  %920 = vst.msk [vmem:[%s3 + $0x8] sm:$0xff] %vm919, %v702
  %921 = vst [vmem:[%s3 + $0x10] sm:$0xff] %v704
  %922 = vst.msk [vmem:[%s3 + $0x18] sm:$0xff] %vm919, %v706
  %923 = vst [vmem:[%s3 + $0x20] sm:$0xff] %v710
  %924 = vst.msk [vmem:[%s3 + $0x28] sm:$0xff] %vm919, %v712
  %925 = vst [vmem:[%s3 + $0x30] sm:$0xff] %v714
  %926 = vst.msk [vmem:[%s3 + $0x38] sm:$0xff] %vm919, %v716
  %927 = vst [vmem:[%s3 + $0x40] sm:$0xff] %v720
  %928 = vst.msk [vmem:[%s3 + $0x48] sm:$0xff] %vm919, %v722
  %929 = vst [vmem:[%s3 + $0x50] sm:$0xff] %v724
  %930 = vst.msk [vmem:[%s3 + $0x58] sm:$0xff] %vm919, %v726
  %931 = vst [vmem:[%s3 + $0x60] sm:$0xff] %v730
  %932 = vst.msk [vmem:[%s3 + $0x68] sm:$0xff] %vm919, %v732
  %933 = vst [vmem:[%s3 + $0x70] sm:$0xff] %v734
  %934 = vst.msk [vmem:[%s3 + $0x78] sm:$0xff] %vm919, %v736
  %935 = vst [vmem:[%s3 + $0x80] sm:$0xff] %v740
  %936 = vst.msk [vmem:[%s3 + $0x88] sm:$0xff] %vm919, %v742
  %937 = vst [vmem:[%s3 + $0x90] sm:$0xff] %v744
  %938 = vst.msk [vmem:[%s3 + $0x98] sm:$0xff] %vm919, %v746
  %939 = vst [vmem:[%s3 + $0xa0] sm:$0xff] %v750
  %940 = vst.msk [vmem:[%s3 + $0xa8] sm:$0xff] %vm919, %v752
  %941 = vst [vmem:[%s3 + $0xb0] sm:$0xff] %v754
  %942 = vst.msk [vmem:[%s3 + $0xb8] sm:$0xff] %vm919, %v756
  %943 = vst [vmem:[%s3 + $0xc0] sm:$0xff] %v760
  %944 = vst.msk [vmem:[%s3 + $0xc8] sm:$0xff] %vm919, %v762
  %945 = vst [vmem:[%s3 + $0xd0] sm:$0xff] %v764
  %946 = vst.msk [vmem:[%s3 + $0xd8] sm:$0xff] %vm919, %v766
  %947 = vst [vmem:[%s3 + $0xe0] sm:$0xff] %v770
  %948 = vst.msk [vmem:[%s3 + $0xe8] sm:$0xff] %vm919, %v772
  %949 = vst [vmem:[%s3 + $0xf0] sm:$0xff] %v774
  %950 = vst.msk [vmem:[%s3 + $0xf8] sm:$0xff] %vm919, %v776
  %951 = vst [vmem:[%s3 + $0x100] sm:$0xff] %v780
  %952 = vst.msk [vmem:[%s3 + $0x108] sm:$0xff] %vm919, %v782
  %953 = vst [vmem:[%s3 + $0x110] sm:$0xff] %v784
  %954 = vst.msk [vmem:[%s3 + $0x118] sm:$0xff] %vm919, %v786
  %955 = vst [vmem:[%s3 + $0x120] sm:$0xff] %v790
  %956 = vst.msk [vmem:[%s3 + $0x128] sm:$0xff] %vm919, %v792
  %957 = vst [vmem:[%s3 + $0x130] sm:$0xff] %v794
  %958 = vst.msk [vmem:[%s3 + $0x138] sm:$0xff] %vm919, %v796
  %959 = vst [vmem:[%s3 + $0x140] sm:$0xff] %v800
  %960 = vst.msk [vmem:[%s3 + $0x148] sm:$0xff] %vm919, %v802
  %961 = vst [vmem:[%s3 + $0x150] sm:$0xff] %v804
  %962 = vst.msk [vmem:[%s3 + $0x158] sm:$0xff] %vm919, %v806
  %963 = vst [vmem:[%s3 + $0x160] sm:$0xff] %v810
  %964 = vst.msk [vmem:[%s3 + $0x168] sm:$0xff] %vm919, %v812
  %965 = vst [vmem:[%s3 + $0x170] sm:$0xff] %v814
  %966 = vst.msk [vmem:[%s3 + $0x178] sm:$0xff] %vm919, %v816
  %967 = vst [vmem:[%s3 + $0x180] sm:$0xff] %v820
  %968 = vst.msk [vmem:[%s3 + $0x188] sm:$0xff] %vm919, %v822
  %969 = vst [vmem:[%s3 + $0x190] sm:$0xff] %v824
  %970 = vst.msk [vmem:[%s3 + $0x198] sm:$0xff] %vm919, %v826
  %971 = vst [vmem:[%s3 + $0x1a0] sm:$0xff] %v830
  %972 = vst.msk [vmem:[%s3 + $0x1a8] sm:$0xff] %vm919, %v832
  %973 = vst [vmem:[%s3 + $0x1b0] sm:$0xff] %v834
  %974 = vst.msk [vmem:[%s3 + $0x1b8] sm:$0xff] %vm919, %v836
  %975 = vst [vmem:[%s3 + $0x1c0] sm:$0xff] %v840
  %976 = vst.msk [vmem:[%s3 + $0x1c8] sm:$0xff] %vm919, %v842
  %977 = vst [vmem:[%s3 + $0x1d0] sm:$0xff] %v844
  %978 = vst.msk [vmem:[%s3 + $0x1d8] sm:$0xff] %vm919, %v846
  %979 = vst [vmem:[%s3 + $0x1e0] sm:$0xff] %v850
  %980 = vst.msk [vmem:[%s3 + $0x1e8] sm:$0xff] %vm919, %v852
  %981 = vst [vmem:[%s3 + $0x1f0] sm:$0xff] %v854
  %982 = vst.msk [vmem:[%s3 + $0x1f8] sm:$0xff] %vm919, %v856
  %983 = vst [vmem:[%s3 + $0x200] sm:$0xff] %v860
  %984 = vst.msk [vmem:[%s3 + $0x208] sm:$0xff] %vm919, %v862
  %985 = vst [vmem:[%s3 + $0x210] sm:$0xff] %v864
  %986 = vst.msk [vmem:[%s3 + $0x218] sm:$0xff] %vm919, %v866
  %987 = vst [vmem:[%s3 + $0x220] sm:$0xff] %v870
  %988 = vst.msk [vmem:[%s3 + $0x228] sm:$0xff] %vm919, %v872
  %989 = vst [vmem:[%s3 + $0x230] sm:$0xff] %v874
  %990 = vst.msk [vmem:[%s3 + $0x238] sm:$0xff] %vm919, %v876
  %991 = vst [vmem:[%s3 + $0x240] sm:$0xff] %v880
  %992 = vst.msk [vmem:[%s3 + $0x248] sm:$0xff] %vm919, %v882
  %993 = vst [vmem:[%s3 + $0x250] sm:$0xff] %v884
  %994 = vst.msk [vmem:[%s3 + $0x258] sm:$0xff] %vm919, %v886
  %995 = vst [vmem:[%s3 + $0x260] sm:$0xff] %v890
  %996 = vst.msk [vmem:[%s3 + $0x268] sm:$0xff] %vm919, %v892
  %997 = vst [vmem:[%s3 + $0x270] sm:$0xff] %v894
  %998 = vst.msk [vmem:[%s3 + $0x278] sm:$0xff] %vm919, %v896
  %999 = vst [vmem:[%s3 + $0x280] sm:$0xff] %v900
  %1000 = vst.msk [vmem:[%s3 + $0x288] sm:$0xff] %vm919, %v902
  %1001 = vst [vmem:[%s3 + $0x290] sm:$0xff] %v904
  %1002 = vst.msk [vmem:[%s3 + $0x298] sm:$0xff] %vm919, %v906
  %1003 = vst [vmem:[%s3 + $0x2a0] sm:$0xff] %v910
  %1004 = vst.msk [vmem:[%s3 + $0x2a8] sm:$0xff] %vm919, %v912
  %1005 = vst [vmem:[%s3 + $0x2b0] sm:$0xff] %v914
  %1006 = vst.msk [vmem:[%s3 + $0x2b8] sm:$0xff] %vm919, %v916
  %v1007 = vld [vmem:[%s3] sm:$0xff]
  %v1008 = vld [vmem:[%s3 + $0x8] sm:$0xff]
  %v1009 = vld [vmem:[%s3 + $0x10] sm:$0xff]
  %v1010 = vld [vmem:[%s3 + $0x18] sm:$0xff]
  %v1011 = vld [vmem:[%s3 + $0x20] sm:$0xff]
  %v1012 = vld [vmem:[%s3 + $0x28] sm:$0xff]
  %v1013 = vld [vmem:[%s3 + $0x30] sm:$0xff]
  %v1014 = vld [vmem:[%s3 + $0x38] sm:$0xff]
  %v1015 = vld [vmem:[%s3 + $0x40] sm:$0xff]
  %v1016 = vld [vmem:[%s3 + $0x48] sm:$0xff]
  %v1017 = vld [vmem:[%s3 + $0x50] sm:$0xff]
  %v1018 = vld [vmem:[%s3 + $0x58] sm:$0xff]
  %v1019 = vld [vmem:[%s3 + $0x60] sm:$0xff]
  %v1020 = vld [vmem:[%s3 + $0x68] sm:$0xff]
  %v1021 = vld [vmem:[%s3 + $0x70] sm:$0xff]
  %v1022 = vld [vmem:[%s3 + $0x78] sm:$0xff]
  %v1023 = vld [vmem:[%s3 + $0x80] sm:$0xff]
  %v1024 = vld [vmem:[%s3 + $0x88] sm:$0xff]
  %v1025 = vld [vmem:[%s3 + $0x90] sm:$0xff]
  %v1026 = vld [vmem:[%s3 + $0x98] sm:$0xff]
  %v1027 = vld [vmem:[%s3 + $0xa0] sm:$0xff]
  %v1028 = vld [vmem:[%s3 + $0xa8] sm:$0xff]
  %v1029 = vld [vmem:[%s3 + $0xb0] sm:$0xff]
  %v1030 = vld [vmem:[%s3 + $0xb8] sm:$0xff]
  %v1031 = vld [vmem:[%s3 + $0xc0] sm:$0xff]
  %v1032 = vld [vmem:[%s3 + $0xc8] sm:$0xff]
  %v1033 = vld [vmem:[%s3 + $0xd0] sm:$0xff]
  %v1034 = vld [vmem:[%s3 + $0xd8] sm:$0xff]
  %v1035 = vld [vmem:[%s3 + $0xe0] sm:$0xff]
  %v1036 = vld [vmem:[%s3 + $0xe8] sm:$0xff]
  %v1037 = vld [vmem:[%s3 + $0xf0] sm:$0xff]
  %v1038 = vld [vmem:[%s3 + $0xf8] sm:$0xff]
  %v1039 = vld [vmem:[%s3 + $0x100] sm:$0xff]
  %v1040 = vld [vmem:[%s3 + $0x108] sm:$0xff]
  %v1041 = vld [vmem:[%s3 + $0x110] sm:$0xff]
  %v1042 = vld [vmem:[%s3 + $0x118] sm:$0xff]
  %v1043 = vld [vmem:[%s3 + $0x120] sm:$0xff]
  %v1044 = vld [vmem:[%s3 + $0x128] sm:$0xff]
  %v1045 = vld [vmem:[%s3 + $0x130] sm:$0xff]
  %v1046 = vld [vmem:[%s3 + $0x138] sm:$0xff]
  %v1047 = vld [vmem:[%s3 + $0x140] sm:$0xff]
  %v1048 = vld [vmem:[%s3 + $0x148] sm:$0xff]
  %v1049 = vld [vmem:[%s3 + $0x150] sm:$0xff]
  %v1050 = vld [vmem:[%s3 + $0x158] sm:$0xff]
  %v1051 = vld [vmem:[%s3 + $0x160] sm:$0xff]
  %v1052 = vld [vmem:[%s3 + $0x168] sm:$0xff]
  %v1053 = vld [vmem:[%s3 + $0x170] sm:$0xff]
  %v1054 = vld [vmem:[%s3 + $0x178] sm:$0xff]
  %v1055 = vld [vmem:[%s3 + $0x180] sm:$0xff]
  %v1056 = vld [vmem:[%s3 + $0x188] sm:$0xff]
  %v1057 = vld [vmem:[%s3 + $0x190] sm:$0xff]
  %v1058 = vld [vmem:[%s3 + $0x198] sm:$0xff]
  %v1059 = vld [vmem:[%s3 + $0x1a0] sm:$0xff]
  %v1060 = vld [vmem:[%s3 + $0x1a8] sm:$0xff]
  %v1061 = vld [vmem:[%s3 + $0x1b0] sm:$0xff]
  %v1062 = vld [vmem:[%s3 + $0x1b8] sm:$0xff]
  %v1063 = vld [vmem:[%s3 + $0x1c0] sm:$0xff]
  %v1064 = vld [vmem:[%s3 + $0x1c8] sm:$0xff]
  %v1065 = vld [vmem:[%s3 + $0x1d0] sm:$0xff]
  %v1066 = vld [vmem:[%s3 + $0x1d8] sm:$0xff]
  %v1067 = vld [vmem:[%s3 + $0x1e0] sm:$0xff]
  %v1068 = vld [vmem:[%s3 + $0x1e8] sm:$0xff]
  %v1069 = vld [vmem:[%s3 + $0x1f0] sm:$0xff]
  %v1070 = vld [vmem:[%s3 + $0x1f8] sm:$0xff]
  %v1071 = vld [vmem:[%s3 + $0x200] sm:$0xff]
  %v1072 = vld [vmem:[%s3 + $0x208] sm:$0xff]
  %v1073 = vld [vmem:[%s3 + $0x210] sm:$0xff]
  %v1074 = vld [vmem:[%s3 + $0x218] sm:$0xff]
  %v1075 = vld [vmem:[%s3 + $0x220] sm:$0xff]
  %v1076 = vld [vmem:[%s3 + $0x228] sm:$0xff]
  %v1077 = vld [vmem:[%s3 + $0x230] sm:$0xff]
  %v1078 = vld [vmem:[%s3 + $0x238] sm:$0xff]
  %v1079 = vld [vmem:[%s3 + $0x240] sm:$0xff]
  %v1080 = vld [vmem:[%s3 + $0x248] sm:$0xff]
  %v1081 = vld [vmem:[%s3 + $0x250] sm:$0xff]
  %v1082 = vld [vmem:[%s3 + $0x258] sm:$0xff]
  %v1083 = vld [vmem:[%s3 + $0x260] sm:$0xff]
  %v1084 = vld [vmem:[%s3 + $0x268] sm:$0xff]
  %v1085 = vld [vmem:[%s3 + $0x270] sm:$0xff]
  %v1086 = vld [vmem:[%s3 + $0x278] sm:$0xff]
  %v1087 = vld [vmem:[%s3 + $0x280] sm:$0xff]
  %v1088 = vld [vmem:[%s3 + $0x288] sm:$0xff]
  %v1089 = vld [vmem:[%s3 + $0x290] sm:$0xff]
  %v1090 = vld [vmem:[%s3 + $0x298] sm:$0xff]
  %v1091 = vld [vmem:[%s3 + $0x2a0] sm:$0xff]
  %v1092 = vld [vmem:[%s3 + $0x2a8] sm:$0xff]
  %v1093 = vld [vmem:[%s3 + $0x2b0] sm:$0xff]
  %v1094 = vld [vmem:[%s3 + $0x2b8] sm:$0xff]
  %v1095 = vsel %vm919, %v1008, 0.0
  %v1096 = vadd.f32 %v1007, %v1095
  %1097 = vadd.xlane.f32.xlu0 %v1096
  %v1098 = vpop.xlane.xlu0 %1097
  %v1099 = vsel %vm919, %v1010, 0.0
  %v1100 = vadd.f32 %v1009, %v1099
  %1101 = vadd.xlane.f32.xlu0 %v1100
  %v1102 = vpop.xlane.xlu0 %1101
  %v1103 = vsel %vm919, %v1012, 0.0
  %v1104 = vadd.f32 %v1011, %v1103
  %1105 = vadd.xlane.f32.xlu0 %v1104
  %v1106 = vpop.xlane.xlu0 %1105
  %v1107 = vsel %vm919, %v1014, 0.0
  %v1108 = vadd.f32 %v1013, %v1107
  %1109 = vadd.xlane.f32.xlu0 %v1108
  %v1110 = vpop.xlane.xlu0 %1109
  %v1111 = vsel %vm919, %v1016, 0.0
  %v1112 = vadd.f32 %v1015, %v1111
  %1113 = vadd.xlane.f32.xlu0 %v1112
  %v1114 = vpop.xlane.xlu0 %1113
  %v1115 = vsel %vm919, %v1018, 0.0
  %v1116 = vadd.f32 %v1017, %v1115
  %1117 = vadd.xlane.f32.xlu0 %v1116
  %v1118 = vpop.xlane.xlu0 %1117
  %v1119 = vsel %vm919, %v1020, 0.0
  %v1120 = vadd.f32 %v1019, %v1119
  %1121 = vadd.xlane.f32.xlu0 %v1120
  %v1122 = vpop.xlane.xlu0 %1121
  %v1123 = vsel %vm919, %v1022, 0.0
  %v1124 = vadd.f32 %v1021, %v1123
  %1125 = vadd.xlane.f32.xlu0 %v1124
  %v1126 = vpop.xlane.xlu0 %1125
  %v1127 = vsel %vm919, %v1024, 0.0
  %v1128 = vadd.f32 %v1023, %v1127
  %1129 = vadd.xlane.f32.xlu0 %v1128
  %v1130 = vpop.xlane.xlu0 %1129
  %v1131 = vsel %vm919, %v1026, 0.0
  %v1132 = vadd.f32 %v1025, %v1131
  %1133 = vadd.xlane.f32.xlu0 %v1132
  %v1134 = vpop.xlane.xlu0 %1133
  %v1135 = vsel %vm919, %v1028, 0.0
  %v1136 = vadd.f32 %v1027, %v1135
  %1137 = vadd.xlane.f32.xlu0 %v1136
  %v1138 = vpop.xlane.xlu0 %1137
  %v1139 = vsel %vm919, %v1030, 0.0
  %v1140 = vadd.f32 %v1029, %v1139
  %1141 = vadd.xlane.f32.xlu0 %v1140
  %v1142 = vpop.xlane.xlu0 %1141
  %v1143 = vsel %vm919, %v1032, 0.0
  %v1144 = vadd.f32 %v1031, %v1143
  %1145 = vadd.xlane.f32.xlu0 %v1144
  %v1146 = vpop.xlane.xlu0 %1145
  %v1147 = vsel %vm919, %v1034, 0.0
  %v1148 = vadd.f32 %v1033, %v1147
  %1149 = vadd.xlane.f32.xlu0 %v1148
  %v1150 = vpop.xlane.xlu0 %1149
  %v1151 = vsel %vm919, %v1036, 0.0
  %v1152 = vadd.f32 %v1035, %v1151
  %1153 = vadd.xlane.f32.xlu0 %v1152
  %v1154 = vpop.xlane.xlu0 %1153
  %v1155 = vsel %vm919, %v1038, 0.0
  %v1156 = vadd.f32 %v1037, %v1155
  %1157 = vadd.xlane.f32.xlu0 %v1156
  %v1158 = vpop.xlane.xlu0 %1157
  %v1159 = vsel %vm919, %v1040, 0.0
  %v1160 = vadd.f32 %v1039, %v1159
  %1161 = vadd.xlane.f32.xlu0 %v1160
  %v1162 = vpop.xlane.xlu0 %1161
  %v1163 = vsel %vm919, %v1042, 0.0
  %v1164 = vadd.f32 %v1041, %v1163
  %1165 = vadd.xlane.f32.xlu0 %v1164
  %v1166 = vpop.xlane.xlu0 %1165
  %v1167 = vsel %vm919, %v1044, 0.0
  %v1168 = vadd.f32 %v1043, %v1167
  %1169 = vadd.xlane.f32.xlu0 %v1168
  %v1170 = vpop.xlane.xlu0 %1169
  %v1171 = vsel %vm919, %v1046, 0.0
  %v1172 = vadd.f32 %v1045, %v1171
  %1173 = vadd.xlane.f32.xlu0 %v1172
  %v1174 = vpop.xlane.xlu0 %1173
  %v1175 = vsel %vm919, %v1048, 0.0
  %v1176 = vadd.f32 %v1047, %v1175
  %1177 = vadd.xlane.f32.xlu0 %v1176
  %v1178 = vpop.xlane.xlu0 %1177
  %v1179 = vsel %vm919, %v1050, 0.0
  %v1180 = vadd.f32 %v1049, %v1179
  %1181 = vadd.xlane.f32.xlu0 %v1180
  %v1182 = vpop.xlane.xlu0 %1181
  %v1183 = vsel %vm919, %v1052, 0.0
  %v1184 = vadd.f32 %v1051, %v1183
  %1185 = vadd.xlane.f32.xlu0 %v1184
  %v1186 = vpop.xlane.xlu0 %1185
  %v1187 = vsel %vm919, %v1054, 0.0
  %v1188 = vadd.f32 %v1053, %v1187
  %1189 = vadd.xlane.f32.xlu0 %v1188
  %v1190 = vpop.xlane.xlu0 %1189
  %v1191 = vsel %vm919, %v1056, 0.0
  %v1192 = vadd.f32 %v1055, %v1191
  %1193 = vadd.xlane.f32.xlu0 %v1192
  %v1194 = vpop.xlane.xlu0 %1193
  %v1195 = vsel %vm919, %v1058, 0.0
  %v1196 = vadd.f32 %v1057, %v1195
  %1197 = vadd.xlane.f32.xlu0 %v1196
  %v1198 = vpop.xlane.xlu0 %1197
  %v1199 = vsel %vm919, %v1060, 0.0
  %v1200 = vadd.f32 %v1059, %v1199
  %1201 = vadd.xlane.f32.xlu0 %v1200
  %v1202 = vpop.xlane.xlu0 %1201
  %v1203 = vsel %vm919, %v1062, 0.0
  %v1204 = vadd.f32 %v1061, %v1203
  %1205 = vadd.xlane.f32.xlu0 %v1204
  %v1206 = vpop.xlane.xlu0 %1205
  %v1207 = vsel %vm919, %v1064, 0.0
  %v1208 = vadd.f32 %v1063, %v1207
  %1209 = vadd.xlane.f32.xlu0 %v1208
  %v1210 = vpop.xlane.xlu0 %1209
  %v1211 = vsel %vm919, %v1066, 0.0
  %v1212 = vadd.f32 %v1065, %v1211
  %1213 = vadd.xlane.f32.xlu0 %v1212
  %v1214 = vpop.xlane.xlu0 %1213
  %v1215 = vsel %vm919, %v1068, 0.0
  %v1216 = vadd.f32 %v1067, %v1215
  %1217 = vadd.xlane.f32.xlu0 %v1216
  %v1218 = vpop.xlane.xlu0 %1217
  %v1219 = vsel %vm919, %v1070, 0.0
  %v1220 = vadd.f32 %v1069, %v1219
  %1221 = vadd.xlane.f32.xlu0 %v1220
  %v1222 = vpop.xlane.xlu0 %1221
  %v1223 = vsel %vm919, %v1072, 0.0
  %v1224 = vadd.f32 %v1071, %v1223
  %1225 = vadd.xlane.f32.xlu0 %v1224
  %v1226 = vpop.xlane.xlu0 %1225
  %v1227 = vsel %vm919, %v1074, 0.0
  %v1228 = vadd.f32 %v1073, %v1227
  %1229 = vadd.xlane.f32.xlu0 %v1228
  %v1230 = vpop.xlane.xlu0 %1229
  %v1231 = vsel %vm919, %v1076, 0.0
  %v1232 = vadd.f32 %v1075, %v1231
  %1233 = vadd.xlane.f32.xlu0 %v1232
  %v1234 = vpop.xlane.xlu0 %1233
  %v1235 = vsel %vm919, %v1078, 0.0
  %v1236 = vadd.f32 %v1077, %v1235
  %1237 = vadd.xlane.f32.xlu0 %v1236
  %v1238 = vpop.xlane.xlu0 %1237
  %v1239 = vsel %vm919, %v1080, 0.0
  %v1240 = vadd.f32 %v1079, %v1239
  %1241 = vadd.xlane.f32.xlu0 %v1240
  %v1242 = vpop.xlane.xlu0 %1241
  %v1243 = vsel %vm919, %v1082, 0.0
  %v1244 = vadd.f32 %v1081, %v1243
  %1245 = vadd.xlane.f32.xlu0 %v1244
  %v1246 = vpop.xlane.xlu0 %1245
  %v1247 = vsel %vm919, %v1084, 0.0
  %v1248 = vadd.f32 %v1083, %v1247
  %1249 = vadd.xlane.f32.xlu0 %v1248
  %v1250 = vpop.xlane.xlu0 %1249
  %v1251 = vsel %vm919, %v1086, 0.0
  %v1252 = vadd.f32 %v1085, %v1251
  %1253 = vadd.xlane.f32.xlu0 %v1252
  %v1254 = vpop.xlane.xlu0 %1253
  %v1255 = vsel %vm919, %v1088, 0.0
  %v1256 = vadd.f32 %v1087, %v1255
  %1257 = vadd.xlane.f32.xlu0 %v1256
  %v1258 = vpop.xlane.xlu0 %1257
  %v1259 = vsel %vm919, %v1090, 0.0
  %v1260 = vadd.f32 %v1089, %v1259
  %1261 = vadd.xlane.f32.xlu0 %v1260
  %v1262 = vpop.xlane.xlu0 %1261
  %v1263 = vsel %vm919, %v1092, 0.0
  %v1264 = vadd.f32 %v1091, %v1263
  %1265 = vadd.xlane.f32.xlu0 %v1264
  %v1266 = vpop.xlane.xlu0 %1265
  %v1267 = vsel %vm919, %v1094, 0.0
  %v1268 = vadd.f32 %v1093, %v1267
  %1269 = vadd.xlane.f32.xlu0 %v1268
  %v1270 = vpop.xlane.xlu0 %1269
  %v1271 = vmul.f32 %v1007, %v1007
  %v1272 = vmul.f32 %v1008, %v1008
  %v1273 = vmul.f32 %v1009, %v1009
  %v1274 = vmul.f32 %v1010, %v1010
  %v1275 = vmul.f32 %v1011, %v1011
  %v1276 = vmul.f32 %v1012, %v1012
  %v1277 = vmul.f32 %v1013, %v1013
  %v1278 = vmul.f32 %v1014, %v1014
  %v1279 = vmul.f32 %v1015, %v1015
  %v1280 = vmul.f32 %v1016, %v1016
  %v1281 = vmul.f32 %v1017, %v1017
  %v1282 = vmul.f32 %v1018, %v1018
  %v1283 = vmul.f32 %v1019, %v1019
  %v1284 = vmul.f32 %v1020, %v1020
  %v1285 = vmul.f32 %v1021, %v1021
  %v1286 = vmul.f32 %v1022, %v1022
  %v1287 = vmul.f32 %v1023, %v1023
  %v1288 = vmul.f32 %v1024, %v1024
  %v1289 = vmul.f32 %v1025, %v1025
  %v1290 = vmul.f32 %v1026, %v1026
  %v1291 = vmul.f32 %v1027, %v1027
  %v1292 = vmul.f32 %v1028, %v1028
  %v1293 = vmul.f32 %v1029, %v1029
  %v1294 = vmul.f32 %v1030, %v1030
  %v1295 = vmul.f32 %v1031, %v1031
  %v1296 = vmul.f32 %v1032, %v1032
  %v1297 = vmul.f32 %v1033, %v1033
  %v1298 = vmul.f32 %v1034, %v1034
  %v1299 = vmul.f32 %v1035, %v1035
  %v1300 = vmul.f32 %v1036, %v1036
  %v1301 = vmul.f32 %v1037, %v1037
  %v1302 = vmul.f32 %v1038, %v1038
  %v1303 = vmul.f32 %v1039, %v1039
  %v1304 = vmul.f32 %v1040, %v1040
  %v1305 = vmul.f32 %v1041, %v1041
  %v1306 = vmul.f32 %v1042, %v1042
  %v1307 = vmul.f32 %v1043, %v1043
  %v1308 = vmul.f32 %v1044, %v1044
  %v1309 = vmul.f32 %v1045, %v1045
  %v1310 = vmul.f32 %v1046, %v1046
  %v1311 = vmul.f32 %v1047, %v1047
  %v1312 = vmul.f32 %v1048, %v1048
  %v1313 = vmul.f32 %v1049, %v1049
  %v1314 = vmul.f32 %v1050, %v1050
  %v1315 = vmul.f32 %v1051, %v1051
  %v1316 = vmul.f32 %v1052, %v1052
  %v1317 = vmul.f32 %v1053, %v1053
  %v1318 = vmul.f32 %v1054, %v1054
  %v1319 = vmul.f32 %v1055, %v1055
  %v1320 = vmul.f32 %v1056, %v1056
  %v1321 = vmul.f32 %v1057, %v1057
  %v1322 = vmul.f32 %v1058, %v1058
  %v1323 = vmul.f32 %v1059, %v1059
  %v1324 = vmul.f32 %v1060, %v1060
  %v1325 = vmul.f32 %v1061, %v1061
  %v1326 = vmul.f32 %v1062, %v1062
  %v1327 = vmul.f32 %v1063, %v1063
  %v1328 = vmul.f32 %v1064, %v1064
  %v1329 = vmul.f32 %v1065, %v1065
  %v1330 = vmul.f32 %v1066, %v1066
  %v1331 = vmul.f32 %v1067, %v1067
  %v1332 = vmul.f32 %v1068, %v1068
  %v1333 = vmul.f32 %v1069, %v1069
  %v1334 = vmul.f32 %v1070, %v1070
  %v1335 = vmul.f32 %v1071, %v1071
  %v1336 = vmul.f32 %v1072, %v1072
  %v1337 = vmul.f32 %v1073, %v1073
  %v1338 = vmul.f32 %v1074, %v1074
  %v1339 = vmul.f32 %v1075, %v1075
  %v1340 = vmul.f32 %v1076, %v1076
  %v1341 = vmul.f32 %v1077, %v1077
  %v1342 = vmul.f32 %v1078, %v1078
  %v1343 = vmul.f32 %v1079, %v1079
  %v1344 = vmul.f32 %v1080, %v1080
  %v1345 = vmul.f32 %v1081, %v1081
  %v1346 = vmul.f32 %v1082, %v1082
  %v1347 = vmul.f32 %v1083, %v1083
  %v1348 = vmul.f32 %v1084, %v1084
  %v1349 = vmul.f32 %v1085, %v1085
  %v1350 = vmul.f32 %v1086, %v1086
  %v1351 = vmul.f32 %v1087, %v1087
  %v1352 = vmul.f32 %v1088, %v1088
  %v1353 = vmul.f32 %v1089, %v1089
  %v1354 = vmul.f32 %v1090, %v1090
  %v1355 = vmul.f32 %v1091, %v1091
  %v1356 = vmul.f32 %v1092, %v1092
  %v1357 = vmul.f32 %v1093, %v1093
  %v1358 = vmul.f32 %v1094, %v1094
  %v1359 = vsel %vm919, %v1272, 0.0
  %v1360 = vadd.f32 %v1271, %v1359
  %1361 = vadd.xlane.f32.xlu0 %v1360
  %v1362 = vpop.xlane.xlu0 %1361
  %v1363 = vsel %vm919, %v1274, 0.0
  %v1364 = vadd.f32 %v1273, %v1363
  %1365 = vadd.xlane.f32.xlu0 %v1364
  %v1366 = vpop.xlane.xlu0 %1365
  %v1367 = vsel %vm919, %v1276, 0.0
  %v1368 = vadd.f32 %v1275, %v1367
  %1369 = vadd.xlane.f32.xlu0 %v1368
  %v1370 = vpop.xlane.xlu0 %1369
  %v1371 = vsel %vm919, %v1278, 0.0
  %v1372 = vadd.f32 %v1277, %v1371
  %1373 = vadd.xlane.f32.xlu0 %v1372
  %v1374 = vpop.xlane.xlu0 %1373
  %v1375 = vsel %vm919, %v1280, 0.0
  %v1376 = vadd.f32 %v1279, %v1375
  %1377 = vadd.xlane.f32.xlu0 %v1376
  %v1378 = vpop.xlane.xlu0 %1377
  %v1379 = vsel %vm919, %v1282, 0.0
  %v1380 = vadd.f32 %v1281, %v1379
  %1381 = vadd.xlane.f32.xlu0 %v1380
  %v1382 = vpop.xlane.xlu0 %1381
  %v1383 = vsel %vm919, %v1284, 0.0
  %v1384 = vadd.f32 %v1283, %v1383
  %1385 = vadd.xlane.f32.xlu0 %v1384
  %v1386 = vpop.xlane.xlu0 %1385
  %v1387 = vsel %vm919, %v1286, 0.0
  %v1388 = vadd.f32 %v1285, %v1387
  %1389 = vadd.xlane.f32.xlu0 %v1388
  %v1390 = vpop.xlane.xlu0 %1389
  %v1391 = vsel %vm919, %v1288, 0.0
  %v1392 = vadd.f32 %v1287, %v1391
  %1393 = vadd.xlane.f32.xlu0 %v1392
  %v1394 = vpop.xlane.xlu0 %1393
  %v1395 = vsel %vm919, %v1290, 0.0
  %v1396 = vadd.f32 %v1289, %v1395
  %1397 = vadd.xlane.f32.xlu0 %v1396
  %v1398 = vpop.xlane.xlu0 %1397
  %v1399 = vsel %vm919, %v1292, 0.0
  %v1400 = vadd.f32 %v1291, %v1399
  %1401 = vadd.xlane.f32.xlu0 %v1400
  %v1402 = vpop.xlane.xlu0 %1401
  %v1403 = vsel %vm919, %v1294, 0.0
  %v1404 = vadd.f32 %v1293, %v1403
  %1405 = vadd.xlane.f32.xlu0 %v1404
  %v1406 = vpop.xlane.xlu0 %1405
  %v1407 = vsel %vm919, %v1296, 0.0
  %v1408 = vadd.f32 %v1295, %v1407
  %1409 = vadd.xlane.f32.xlu0 %v1408
  %v1410 = vpop.xlane.xlu0 %1409
  %v1411 = vsel %vm919, %v1298, 0.0
  %v1412 = vadd.f32 %v1297, %v1411
  %1413 = vadd.xlane.f32.xlu0 %v1412
  %v1414 = vpop.xlane.xlu0 %1413
  %v1415 = vsel %vm919, %v1300, 0.0
  %v1416 = vadd.f32 %v1299, %v1415
  %1417 = vadd.xlane.f32.xlu0 %v1416
  %v1418 = vpop.xlane.xlu0 %1417
  %v1419 = vsel %vm919, %v1302, 0.0
  %v1420 = vadd.f32 %v1301, %v1419
  %1421 = vadd.xlane.f32.xlu0 %v1420
  %v1422 = vpop.xlane.xlu0 %1421
  %v1423 = vsel %vm919, %v1304, 0.0
  %v1424 = vadd.f32 %v1303, %v1423
  %1425 = vadd.xlane.f32.xlu0 %v1424
  %v1426 = vpop.xlane.xlu0 %1425
  %v1427 = vsel %vm919, %v1306, 0.0
  %v1428 = vadd.f32 %v1305, %v1427
  %1429 = vadd.xlane.f32.xlu0 %v1428
  %v1430 = vpop.xlane.xlu0 %1429
  %v1431 = vsel %vm919, %v1308, 0.0
  %v1432 = vadd.f32 %v1307, %v1431
  %1433 = vadd.xlane.f32.xlu0 %v1432
  %v1434 = vpop.xlane.xlu0 %1433
  %v1435 = vsel %vm919, %v1310, 0.0
  %v1436 = vadd.f32 %v1309, %v1435
  %1437 = vadd.xlane.f32.xlu0 %v1436
  %v1438 = vpop.xlane.xlu0 %1437
  %v1439 = vsel %vm919, %v1312, 0.0
  %v1440 = vadd.f32 %v1311, %v1439
  %1441 = vadd.xlane.f32.xlu0 %v1440
  %v1442 = vpop.xlane.xlu0 %1441
  %v1443 = vsel %vm919, %v1314, 0.0
  %v1444 = vadd.f32 %v1313, %v1443
  %1445 = vadd.xlane.f32.xlu0 %v1444
  %v1446 = vpop.xlane.xlu0 %1445
  %v1447 = vsel %vm919, %v1316, 0.0
  %v1448 = vadd.f32 %v1315, %v1447
  %1449 = vadd.xlane.f32.xlu0 %v1448
  %v1450 = vpop.xlane.xlu0 %1449
  %v1451 = vsel %vm919, %v1318, 0.0
  %v1452 = vadd.f32 %v1317, %v1451
  %1453 = vadd.xlane.f32.xlu0 %v1452
  %v1454 = vpop.xlane.xlu0 %1453
  %v1455 = vsel %vm919, %v1320, 0.0
  %v1456 = vadd.f32 %v1319, %v1455
  %1457 = vadd.xlane.f32.xlu0 %v1456
  %v1458 = vpop.xlane.xlu0 %1457
  %v1459 = vsel %vm919, %v1322, 0.0
  %v1460 = vadd.f32 %v1321, %v1459
  %1461 = vadd.xlane.f32.xlu0 %v1460
  %v1462 = vpop.xlane.xlu0 %1461
  %v1463 = vsel %vm919, %v1324, 0.0
  %v1464 = vadd.f32 %v1323, %v1463
  %1465 = vadd.xlane.f32.xlu0 %v1464
  %v1466 = vpop.xlane.xlu0 %1465
  %v1467 = vsel %vm919, %v1326, 0.0
  %v1468 = vadd.f32 %v1325, %v1467
  %1469 = vadd.xlane.f32.xlu0 %v1468
  %v1470 = vpop.xlane.xlu0 %1469
  %v1471 = vsel %vm919, %v1328, 0.0
  %v1472 = vadd.f32 %v1327, %v1471
  %1473 = vadd.xlane.f32.xlu0 %v1472
  %v1474 = vpop.xlane.xlu0 %1473
  %v1475 = vsel %vm919, %v1330, 0.0
  %v1476 = vadd.f32 %v1329, %v1475
  %1477 = vadd.xlane.f32.xlu0 %v1476
  %v1478 = vpop.xlane.xlu0 %1477
  %v1479 = vsel %vm919, %v1332, 0.0
  %v1480 = vadd.f32 %v1331, %v1479
  %1481 = vadd.xlane.f32.xlu0 %v1480
  %v1482 = vpop.xlane.xlu0 %1481
  %v1483 = vsel %vm919, %v1334, 0.0
  %v1484 = vadd.f32 %v1333, %v1483
  %1485 = vadd.xlane.f32.xlu0 %v1484
  %v1486 = vpop.xlane.xlu0 %1485
  %v1487 = vsel %vm919, %v1336, 0.0
  %v1488 = vadd.f32 %v1335, %v1487
  %1489 = vadd.xlane.f32.xlu0 %v1488
  %v1490 = vpop.xlane.xlu0 %1489
  %v1491 = vsel %vm919, %v1338, 0.0
  %v1492 = vadd.f32 %v1337, %v1491
  %1493 = vadd.xlane.f32.xlu0 %v1492
  %v1494 = vpop.xlane.xlu0 %1493
  %v1495 = vsel %vm919, %v1340, 0.0
  %v1496 = vadd.f32 %v1339, %v1495
  %1497 = vadd.xlane.f32.xlu0 %v1496
  %v1498 = vpop.xlane.xlu0 %1497
  %v1499 = vsel %vm919, %v1342, 0.0
  %v1500 = vadd.f32 %v1341, %v1499
  %1501 = vadd.xlane.f32.xlu0 %v1500
  %v1502 = vpop.xlane.xlu0 %1501
  %v1503 = vsel %vm919, %v1344, 0.0
  %v1504 = vadd.f32 %v1343, %v1503
  %1505 = vadd.xlane.f32.xlu0 %v1504
  %v1506 = vpop.xlane.xlu0 %1505
  %v1507 = vsel %vm919, %v1346, 0.0
  %v1508 = vadd.f32 %v1345, %v1507
  %1509 = vadd.xlane.f32.xlu0 %v1508
  %v1510 = vpop.xlane.xlu0 %1509
  %v1511 = vsel %vm919, %v1348, 0.0
  %v1512 = vadd.f32 %v1347, %v1511
  %1513 = vadd.xlane.f32.xlu0 %v1512
  %v1514 = vpop.xlane.xlu0 %1513
  %v1515 = vsel %vm919, %v1350, 0.0
  %v1516 = vadd.f32 %v1349, %v1515
  %1517 = vadd.xlane.f32.xlu0 %v1516
  %v1518 = vpop.xlane.xlu0 %1517
  %v1519 = vsel %vm919, %v1352, 0.0
  %v1520 = vadd.f32 %v1351, %v1519
  %1521 = vadd.xlane.f32.xlu0 %v1520
  %v1522 = vpop.xlane.xlu0 %1521
  %v1523 = vsel %vm919, %v1354, 0.0
  %v1524 = vadd.f32 %v1353, %v1523
  %1525 = vadd.xlane.f32.xlu0 %v1524
  %v1526 = vpop.xlane.xlu0 %1525
  %v1527 = vsel %vm919, %v1356, 0.0
  %v1528 = vadd.f32 %v1355, %v1527
  %1529 = vadd.xlane.f32.xlu0 %v1528
  %v1530 = vpop.xlane.xlu0 %1529
  %v1531 = vsel %vm919, %v1358, 0.0
  %v1532 = vadd.f32 %v1357, %v1531
  %1533 = vadd.xlane.f32.xlu0 %v1532
  %v1534 = vpop.xlane.xlu0 %1533
  %v1535 = vmul.f32 %v1098, 0.0051020407
  %v1536 = vmul.f32 %v1102, 0.0051020407
  %v1537 = vmul.f32 %v1106, 0.0051020407
  %v1538 = vmul.f32 %v1110, 0.0051020407
  %v1539 = vmul.f32 %v1114, 0.0051020407
  %v1540 = vmul.f32 %v1118, 0.0051020407
  %v1541 = vmul.f32 %v1122, 0.0051020407
  %v1542 = vmul.f32 %v1126, 0.0051020407
  %v1543 = vmul.f32 %v1130, 0.0051020407
  %v1544 = vmul.f32 %v1134, 0.0051020407
  %v1545 = vmul.f32 %v1138, 0.0051020407
  %v1546 = vmul.f32 %v1142, 0.0051020407
  %v1547 = vmul.f32 %v1146, 0.0051020407
  %v1548 = vmul.f32 %v1150, 0.0051020407
  %v1549 = vmul.f32 %v1154, 0.0051020407
  %v1550 = vmul.f32 %v1158, 0.0051020407
  %v1551 = vmul.f32 %v1162, 0.0051020407
  %v1552 = vmul.f32 %v1166, 0.0051020407
  %v1553 = vmul.f32 %v1170, 0.0051020407
  %v1554 = vmul.f32 %v1174, 0.0051020407
  %v1555 = vmul.f32 %v1178, 0.0051020407
  %v1556 = vmul.f32 %v1182, 0.0051020407
  %v1557 = vmul.f32 %v1186, 0.0051020407
  %v1558 = vmul.f32 %v1190, 0.0051020407
  %v1559 = vmul.f32 %v1194, 0.0051020407
  %v1560 = vmul.f32 %v1198, 0.0051020407
  %v1561 = vmul.f32 %v1202, 0.0051020407
  %v1562 = vmul.f32 %v1206, 0.0051020407
  %v1563 = vmul.f32 %v1210, 0.0051020407
  %v1564 = vmul.f32 %v1214, 0.0051020407
  %v1565 = vmul.f32 %v1218, 0.0051020407
  %v1566 = vmul.f32 %v1222, 0.0051020407
  %v1567 = vmul.f32 %v1226, 0.0051020407
  %v1568 = vmul.f32 %v1230, 0.0051020407
  %v1569 = vmul.f32 %v1234, 0.0051020407
  %v1570 = vmul.f32 %v1238, 0.0051020407
  %v1571 = vmul.f32 %v1242, 0.0051020407
  %v1572 = vmul.f32 %v1246, 0.0051020407
  %v1573 = vmul.f32 %v1250, 0.0051020407
  %v1574 = vmul.f32 %v1254, 0.0051020407
  %v1575 = vmul.f32 %v1258, 0.0051020407
  %v1576 = vmul.f32 %v1262, 0.0051020407
  %v1577 = vmul.f32 %v1266, 0.0051020407
  %v1578 = vmul.f32 %v1270, 0.0051020407
  %v1579 = vmul.f32 %v1362, 0.0051020407
  %v1580 = vmul.f32 %v1366, 0.0051020407
  %v1581 = vmul.f32 %v1370, 0.0051020407
  %v1582 = vmul.f32 %v1374, 0.0051020407
  %v1583 = vmul.f32 %v1378, 0.0051020407
  %v1584 = vmul.f32 %v1382, 0.0051020407
  %v1585 = vmul.f32 %v1386, 0.0051020407
  %v1586 = vmul.f32 %v1390, 0.0051020407
  %v1587 = vmul.f32 %v1394, 0.0051020407
  %v1588 = vmul.f32 %v1398, 0.0051020407
  %v1589 = vmul.f32 %v1402, 0.0051020407
  %v1590 = vmul.f32 %v1406, 0.0051020407
  %v1591 = vmul.f32 %v1410, 0.0051020407
  %v1592 = vmul.f32 %v1414, 0.0051020407
  %v1593 = vmul.f32 %v1418, 0.0051020407
  %v1594 = vmul.f32 %v1422, 0.0051020407
  %v1595 = vmul.f32 %v1426, 0.0051020407
  %v1596 = vmul.f32 %v1430, 0.0051020407
  %v1597 = vmul.f32 %v1434, 0.0051020407
  %v1598 = vmul.f32 %v1438, 0.0051020407
  %v1599 = vmul.f32 %v1442, 0.0051020407
  %v1600 = vmul.f32 %v1446, 0.0051020407
  %v1601 = vmul.f32 %v1450, 0.0051020407
  %v1602 = vmul.f32 %v1454, 0.0051020407
  %v1603 = vmul.f32 %v1458, 0.0051020407
  %v1604 = vmul.f32 %v1462, 0.0051020407
  %v1605 = vmul.f32 %v1466, 0.0051020407
  %v1606 = vmul.f32 %v1470, 0.0051020407
  %v1607 = vmul.f32 %v1474, 0.0051020407
  %v1608 = vmul.f32 %v1478, 0.0051020407
  %v1609 = vmul.f32 %v1482, 0.0051020407
  %v1610 = vmul.f32 %v1486, 0.0051020407
  %v1611 = vmul.f32 %v1490, 0.0051020407
  %v1612 = vmul.f32 %v1494, 0.0051020407
  %v1613 = vmul.f32 %v1498, 0.0051020407
  %v1614 = vmul.f32 %v1502, 0.0051020407
  %v1615 = vmul.f32 %v1506, 0.0051020407
  %v1616 = vmul.f32 %v1510, 0.0051020407
  %v1617 = vmul.f32 %v1514, 0.0051020407
  %v1618 = vmul.f32 %v1518, 0.0051020407
  %v1619 = vmul.f32 %v1522, 0.0051020407
  %v1620 = vmul.f32 %v1526, 0.0051020407
  %v1621 = vmul.f32 %v1530, 0.0051020407
  %v1622 = vmul.f32 %v1534, 0.0051020407
  %v1623 = vmul.f32 %v1535, %v1535
  %v1624 = vmul.f32 %v1536, %v1536
  %v1625 = vmul.f32 %v1537, %v1537
  %v1626 = vmul.f32 %v1538, %v1538
  %v1627 = vmul.f32 %v1539, %v1539
  %v1628 = vmul.f32 %v1540, %v1540
  %v1629 = vmul.f32 %v1541, %v1541
  %v1630 = vmul.f32 %v1542, %v1542
  %v1631 = vmul.f32 %v1543, %v1543
  %v1632 = vmul.f32 %v1544, %v1544
  %v1633 = vmul.f32 %v1545, %v1545
  %v1634 = vmul.f32 %v1546, %v1546
  %v1635 = vmul.f32 %v1547, %v1547
  %v1636 = vmul.f32 %v1548, %v1548
  %v1637 = vmul.f32 %v1549, %v1549
  %v1638 = vmul.f32 %v1550, %v1550
  %v1639 = vmul.f32 %v1551, %v1551
  %v1640 = vmul.f32 %v1552, %v1552
  %v1641 = vmul.f32 %v1553, %v1553
  %v1642 = vmul.f32 %v1554, %v1554
  %v1643 = vmul.f32 %v1555, %v1555
  %v1644 = vmul.f32 %v1556, %v1556
  %v1645 = vmul.f32 %v1557, %v1557
  %v1646 = vmul.f32 %v1558, %v1558
  %v1647 = vmul.f32 %v1559, %v1559
  %v1648 = vmul.f32 %v1560, %v1560
  %v1649 = vmul.f32 %v1561, %v1561
  %v1650 = vmul.f32 %v1562, %v1562
  %v1651 = vmul.f32 %v1563, %v1563
  %v1652 = vmul.f32 %v1564, %v1564
  %v1653 = vmul.f32 %v1565, %v1565
  %v1654 = vmul.f32 %v1566, %v1566
  %v1655 = vmul.f32 %v1567, %v1567
  %v1656 = vmul.f32 %v1568, %v1568
  %v1657 = vmul.f32 %v1569, %v1569
  %v1658 = vmul.f32 %v1570, %v1570
  %v1659 = vmul.f32 %v1571, %v1571
  %v1660 = vmul.f32 %v1572, %v1572
  %v1661 = vmul.f32 %v1573, %v1573
  %v1662 = vmul.f32 %v1574, %v1574
  %v1663 = vmul.f32 %v1575, %v1575
  %v1664 = vmul.f32 %v1576, %v1576
  %v1665 = vmul.f32 %v1577, %v1577
  %v1666 = vmul.f32 %v1578, %v1578
  %v1667 = vsub.f32 %v1579, %v1623
  %v1668 = vsub.f32 %v1580, %v1624
  %v1669 = vsub.f32 %v1581, %v1625
  %v1670 = vsub.f32 %v1582, %v1626
  %v1671 = vsub.f32 %v1583, %v1627
  %v1672 = vsub.f32 %v1584, %v1628
  %v1673 = vsub.f32 %v1585, %v1629
  %v1674 = vsub.f32 %v1586, %v1630
  %v1675 = vsub.f32 %v1587, %v1631
  %v1676 = vsub.f32 %v1588, %v1632
  %v1677 = vsub.f32 %v1589, %v1633
  %v1678 = vsub.f32 %v1590, %v1634
  %v1679 = vsub.f32 %v1591, %v1635
  %v1680 = vsub.f32 %v1592, %v1636
  %v1681 = vsub.f32 %v1593, %v1637
  %v1682 = vsub.f32 %v1594, %v1638
  %v1683 = vsub.f32 %v1595, %v1639
  %v1684 = vsub.f32 %v1596, %v1640
  %v1685 = vsub.f32 %v1597, %v1641
  %v1686 = vsub.f32 %v1598, %v1642
  %v1687 = vsub.f32 %v1599, %v1643
  %v1688 = vsub.f32 %v1600, %v1644
  %v1689 = vsub.f32 %v1601, %v1645
  %v1690 = vsub.f32 %v1602, %v1646
  %v1691 = vsub.f32 %v1603, %v1647
  %v1692 = vsub.f32 %v1604, %v1648
  %v1693 = vsub.f32 %v1605, %v1649
  %v1694 = vsub.f32 %v1606, %v1650
  %v1695 = vsub.f32 %v1607, %v1651
  %v1696 = vsub.f32 %v1608, %v1652
  %v1697 = vsub.f32 %v1609, %v1653
  %v1698 = vsub.f32 %v1610, %v1654
  %v1699 = vsub.f32 %v1611, %v1655
  %v1700 = vsub.f32 %v1612, %v1656
  %v1701 = vsub.f32 %v1613, %v1657
  %v1702 = vsub.f32 %v1614, %v1658
  %v1703 = vsub.f32 %v1615, %v1659
  %v1704 = vsub.f32 %v1616, %v1660
  %v1705 = vsub.f32 %v1617, %v1661
  %v1706 = vsub.f32 %v1618, %v1662
  %v1707 = vsub.f32 %v1619, %v1663
  %v1708 = vsub.f32 %v1620, %v1664
  %v1709 = vsub.f32 %v1621, %v1665
  %v1710 = vsub.f32 %v1622, %v1666
  %v1711 = vmax.f32 %v1667, 0.0
  %v1712 = vmax.f32 %v1668, 0.0
  %v1713 = vmax.f32 %v1669, 0.0
  %v1714 = vmax.f32 %v1670, 0.0
  %v1715 = vmax.f32 %v1671, 0.0
  %v1716 = vmax.f32 %v1672, 0.0
  %v1717 = vmax.f32 %v1673, 0.0
  %v1718 = vmax.f32 %v1674, 0.0
  %v1719 = vmax.f32 %v1675, 0.0
  %v1720 = vmax.f32 %v1676, 0.0
  %v1721 = vmax.f32 %v1677, 0.0
  %v1722 = vmax.f32 %v1678, 0.0
  %v1723 = vmax.f32 %v1679, 0.0
  %v1724 = vmax.f32 %v1680, 0.0
  %v1725 = vmax.f32 %v1681, 0.0
  %v1726 = vmax.f32 %v1682, 0.0
  %v1727 = vmax.f32 %v1683, 0.0
  %v1728 = vmax.f32 %v1684, 0.0
  %v1729 = vmax.f32 %v1685, 0.0
  %v1730 = vmax.f32 %v1686, 0.0
  %v1731 = vmax.f32 %v1687, 0.0
  %v1732 = vmax.f32 %v1688, 0.0
  %v1733 = vmax.f32 %v1689, 0.0
  %v1734 = vmax.f32 %v1690, 0.0
  %v1735 = vmax.f32 %v1691, 0.0
  %v1736 = vmax.f32 %v1692, 0.0
  %v1737 = vmax.f32 %v1693, 0.0
  %v1738 = vmax.f32 %v1694, 0.0
  %v1739 = vmax.f32 %v1695, 0.0
  %v1740 = vmax.f32 %v1696, 0.0
  %v1741 = vmax.f32 %v1697, 0.0
  %v1742 = vmax.f32 %v1698, 0.0
  %v1743 = vmax.f32 %v1699, 0.0
  %v1744 = vmax.f32 %v1700, 0.0
  %v1745 = vmax.f32 %v1701, 0.0
  %v1746 = vmax.f32 %v1702, 0.0
  %v1747 = vmax.f32 %v1703, 0.0
  %v1748 = vmax.f32 %v1704, 0.0
  %v1749 = vmax.f32 %v1705, 0.0
  %v1750 = vmax.f32 %v1706, 0.0
  %v1751 = vmax.f32 %v1707, 0.0
  %v1752 = vmax.f32 %v1708, 0.0
  %v1753 = vmax.f32 %v1709, 0.0
  %v1754 = vmax.f32 %v1710, 0.0
  %v1755 = vld [vmem:[%s2] sm:$0xff]
  %v1756 = vld [vmem:[%s2 + $0x8] sm:$0xff]
  %v1757 = vld [vmem:[%s2 + $0x10] sm:$0xff]
  %v1758 = vld [vmem:[%s2 + $0x18] sm:$0xff]
  %v1759 = vld [vmem:[%s2 + $0x20] sm:$0xff]
  %v1760 = vld [vmem:[%s2 + $0x28] sm:$0xff]
  %v1761 = vld [vmem:[%s2 + $0x30] sm:$0xff]
  %v1762 = vld [vmem:[%s2 + $0x38] sm:$0xff]
  %v1763 = vld [vmem:[%s2 + $0x40] sm:$0xff]
  %v1764 = vld [vmem:[%s2 + $0x48] sm:$0xff]
  %v1765 = vld [vmem:[%s2 + $0x50] sm:$0xff]
  %v1766 = vld [vmem:[%s2 + $0x58] sm:$0xff]
  %v1767 = vld [vmem:[%s2 + $0x60] sm:$0xff]
  %v1768 = vld [vmem:[%s2 + $0x68] sm:$0xff]
  %v1769 = vld [vmem:[%s2 + $0x70] sm:$0xff]
  %v1770 = vld [vmem:[%s2 + $0x78] sm:$0xff]
  %v1771 = vld [vmem:[%s2 + $0x80] sm:$0xff]
  %v1772 = vld [vmem:[%s2 + $0x88] sm:$0xff]
  %v1773 = vld [vmem:[%s2 + $0x90] sm:$0xff]
  %v1774 = vld [vmem:[%s2 + $0x98] sm:$0xff]
  %v1775 = vld [vmem:[%s2 + $0xa0] sm:$0xff]
  %v1776 = vld [vmem:[%s2 + $0xa8] sm:$0xff]
  %v1777 = vld [vmem:[%s2 + $0xb0] sm:$0xff]
  %v1778 = vld [vmem:[%s2 + $0xb8] sm:$0xff]
  %v1779 = vld [vmem:[%s2 + $0xc0] sm:$0xff]
  %v1780 = vld [vmem:[%s2 + $0xc8] sm:$0xff]
  %v1781 = vld [vmem:[%s2 + $0xd0] sm:$0xff]
  %v1782 = vld [vmem:[%s2 + $0xd8] sm:$0xff]
  %v1783 = vld [vmem:[%s2 + $0xe0] sm:$0xff]
  %v1784 = vld [vmem:[%s2 + $0xe8] sm:$0xff]
  %v1785 = vld [vmem:[%s2 + $0xf0] sm:$0xff]
  %v1786 = vld [vmem:[%s2 + $0xf8] sm:$0xff]
  %v1787 = vld [vmem:[%s2 + $0x100] sm:$0xff]
  %v1788 = vld [vmem:[%s2 + $0x108] sm:$0xff]
  %v1789 = vld [vmem:[%s2 + $0x110] sm:$0xff]
  %v1790 = vld [vmem:[%s2 + $0x118] sm:$0xff]
  %v1791 = vld [vmem:[%s2 + $0x120] sm:$0xff]
  %v1792 = vld [vmem:[%s2 + $0x128] sm:$0xff]
  %v1793 = vld [vmem:[%s2 + $0x130] sm:$0xff]
  %v1794 = vld [vmem:[%s2 + $0x138] sm:$0xff]
  %v1795 = vld [vmem:[%s2 + $0x140] sm:$0xff]
  %v1796 = vld [vmem:[%s2 + $0x148] sm:$0xff]
  %v1797 = vld [vmem:[%s2 + $0x150] sm:$0xff]
  %v1798 = vld [vmem:[%s2 + $0x158] sm:$0xff]
  %v1799 = vadd.f32 %v1711, 1e-05
  %v1800 = vadd.f32 %v1712, 1e-05
  %v1801 = vadd.f32 %v1713, 1e-05
  %v1802 = vadd.f32 %v1714, 1e-05
  %v1803 = vadd.f32 %v1715, 1e-05
  %v1804 = vadd.f32 %v1716, 1e-05
  %v1805 = vadd.f32 %v1717, 1e-05
  %v1806 = vadd.f32 %v1718, 1e-05
  %v1807 = vadd.f32 %v1719, 1e-05
  %v1808 = vadd.f32 %v1720, 1e-05
  %v1809 = vadd.f32 %v1721, 1e-05
  %v1810 = vadd.f32 %v1722, 1e-05
  %v1811 = vadd.f32 %v1723, 1e-05
  %v1812 = vadd.f32 %v1724, 1e-05
  %v1813 = vadd.f32 %v1725, 1e-05
  %v1814 = vadd.f32 %v1726, 1e-05
  %v1815 = vadd.f32 %v1727, 1e-05
  %v1816 = vadd.f32 %v1728, 1e-05
  %v1817 = vadd.f32 %v1729, 1e-05
  %v1818 = vadd.f32 %v1730, 1e-05
  %v1819 = vadd.f32 %v1731, 1e-05
  %v1820 = vadd.f32 %v1732, 1e-05
  %v1821 = vadd.f32 %v1733, 1e-05
  %v1822 = vadd.f32 %v1734, 1e-05
  %v1823 = vadd.f32 %v1735, 1e-05
  %v1824 = vadd.f32 %v1736, 1e-05
  %v1825 = vadd.f32 %v1737, 1e-05
  %v1826 = vadd.f32 %v1738, 1e-05
  %v1827 = vadd.f32 %v1739, 1e-05
  %v1828 = vadd.f32 %v1740, 1e-05
  %v1829 = vadd.f32 %v1741, 1e-05
  %v1830 = vadd.f32 %v1742, 1e-05
  %v1831 = vadd.f32 %v1743, 1e-05
  %v1832 = vadd.f32 %v1744, 1e-05
  %v1833 = vadd.f32 %v1745, 1e-05
  %v1834 = vadd.f32 %v1746, 1e-05
  %v1835 = vadd.f32 %v1747, 1e-05
  %v1836 = vadd.f32 %v1748, 1e-05
  %v1837 = vadd.f32 %v1749, 1e-05
  %v1838 = vadd.f32 %v1750, 1e-05
  %v1839 = vadd.f32 %v1751, 1e-05
  %v1840 = vadd.f32 %v1752, 1e-05
  %v1841 = vadd.f32 %v1753, 1e-05
  %v1842 = vadd.f32 %v1754, 1e-05
  %v1843 = vrsqrt.pop %v1799
  %v1844 = vrsqrt.pop %v1800
  %v1845 = vrsqrt.pop %v1801
  %v1846 = vrsqrt.pop %v1802
  %v1847 = vrsqrt.pop %v1803
  %v1848 = vrsqrt.pop %v1804
  %v1849 = vrsqrt.pop %v1805
  %v1850 = vrsqrt.pop %v1806
  %v1851 = vrsqrt.pop %v1807
  %v1852 = vrsqrt.pop %v1808
  %v1853 = vrsqrt.pop %v1809
  %v1854 = vrsqrt.pop %v1810
  %v1855 = vrsqrt.pop %v1811
  %v1856 = vrsqrt.pop %v1812
  %v1857 = vrsqrt.pop %v1813
  %v1858 = vrsqrt.pop %v1814
  %v1859 = vrsqrt.pop %v1815
  %v1860 = vrsqrt.pop %v1816
  %v1861 = vrsqrt.pop %v1817
  %v1862 = vrsqrt.pop %v1818
  %v1863 = vrsqrt.pop %v1819
  %v1864 = vrsqrt.pop %v1820
  %v1865 = vrsqrt.pop %v1821
  %v1866 = vrsqrt.pop %v1822
  %v1867 = vrsqrt.pop %v1823
  %v1868 = vrsqrt.pop %v1824
  %v1869 = vrsqrt.pop %v1825
  %v1870 = vrsqrt.pop %v1826
  %v1871 = vrsqrt.pop %v1827
  %v1872 = vrsqrt.pop %v1828
  %v1873 = vrsqrt.pop %v1829
  %v1874 = vrsqrt.pop %v1830
  %v1875 = vrsqrt.pop %v1831
  %v1876 = vrsqrt.pop %v1832
  %v1877 = vrsqrt.pop %v1833
  %v1878 = vrsqrt.pop %v1834
  %v1879 = vrsqrt.pop %v1835
  %v1880 = vrsqrt.pop %v1836
  %v1881 = vrsqrt.pop %v1837
  %v1882 = vrsqrt.pop %v1838
  %v1883 = vrsqrt.pop %v1839
  %v1884 = vrsqrt.pop %v1840
  %v1885 = vrsqrt.pop %v1841
  %v1886 = vrsqrt.pop %v1842
  %v1887 = vmul.f32 %v1755, %v1843
  %v1888 = vmul.f32 %v1756, %v1844
  %v1889 = vmul.f32 %v1757, %v1845
  %v1890 = vmul.f32 %v1758, %v1846
  %v1891 = vmul.f32 %v1759, %v1847
  %v1892 = vmul.f32 %v1760, %v1848
  %v1893 = vmul.f32 %v1761, %v1849
  %v1894 = vmul.f32 %v1762, %v1850
  %v1895 = vmul.f32 %v1763, %v1851
  %v1896 = vmul.f32 %v1764, %v1852
  %v1897 = vmul.f32 %v1765, %v1853
  %v1898 = vmul.f32 %v1766, %v1854
  %v1899 = vmul.f32 %v1767, %v1855
  %v1900 = vmul.f32 %v1768, %v1856
  %v1901 = vmul.f32 %v1769, %v1857
  %v1902 = vmul.f32 %v1770, %v1858
  %v1903 = vmul.f32 %v1771, %v1859
  %v1904 = vmul.f32 %v1772, %v1860
  %v1905 = vmul.f32 %v1773, %v1861
  %v1906 = vmul.f32 %v1774, %v1862
  %v1907 = vmul.f32 %v1775, %v1863
  %v1908 = vmul.f32 %v1776, %v1864
  %v1909 = vmul.f32 %v1777, %v1865
  %v1910 = vmul.f32 %v1778, %v1866
  %v1911 = vmul.f32 %v1779, %v1867
  %v1912 = vmul.f32 %v1780, %v1868
  %v1913 = vmul.f32 %v1781, %v1869
  %v1914 = vmul.f32 %v1782, %v1870
  %v1915 = vmul.f32 %v1783, %v1871
  %v1916 = vmul.f32 %v1784, %v1872
  %v1917 = vmul.f32 %v1785, %v1873
  %v1918 = vmul.f32 %v1786, %v1874
  %v1919 = vmul.f32 %v1787, %v1875
  %v1920 = vmul.f32 %v1788, %v1876
  %v1921 = vmul.f32 %v1789, %v1877
  %v1922 = vmul.f32 %v1790, %v1878
  %v1923 = vmul.f32 %v1791, %v1879
  %v1924 = vmul.f32 %v1792, %v1880
  %v1925 = vmul.f32 %v1793, %v1881
  %v1926 = vmul.f32 %v1794, %v1882
  %v1927 = vmul.f32 %v1795, %v1883
  %v1928 = vmul.f32 %v1796, %v1884
  %v1929 = vmul.f32 %v1797, %v1885
  %v1930 = vmul.f32 %v1798, %v1886
  %v1931 = vmul.f32 %v1535, %v1887
  %v1932 = vmul.f32 %v1536, %v1888
  %v1933 = vmul.f32 %v1537, %v1889
  %v1934 = vmul.f32 %v1538, %v1890
  %v1935 = vmul.f32 %v1539, %v1891
  %v1936 = vmul.f32 %v1540, %v1892
  %v1937 = vmul.f32 %v1541, %v1893
  %v1938 = vmul.f32 %v1542, %v1894
  %v1939 = vmul.f32 %v1543, %v1895
  %v1940 = vmul.f32 %v1544, %v1896
  %v1941 = vmul.f32 %v1545, %v1897
  %v1942 = vmul.f32 %v1546, %v1898
  %v1943 = vmul.f32 %v1547, %v1899
  %v1944 = vmul.f32 %v1548, %v1900
  %v1945 = vmul.f32 %v1549, %v1901
  %v1946 = vmul.f32 %v1550, %v1902
  %v1947 = vmul.f32 %v1551, %v1903
  %v1948 = vmul.f32 %v1552, %v1904
  %v1949 = vmul.f32 %v1553, %v1905
  %v1950 = vmul.f32 %v1554, %v1906
  %v1951 = vmul.f32 %v1555, %v1907
  %v1952 = vmul.f32 %v1556, %v1908
  %v1953 = vmul.f32 %v1557, %v1909
  %v1954 = vmul.f32 %v1558, %v1910
  %v1955 = vmul.f32 %v1559, %v1911
  %v1956 = vmul.f32 %v1560, %v1912
  %v1957 = vmul.f32 %v1561, %v1913
  %v1958 = vmul.f32 %v1562, %v1914
  %v1959 = vmul.f32 %v1563, %v1915
  %v1960 = vmul.f32 %v1564, %v1916
  %v1961 = vmul.f32 %v1565, %v1917
  %v1962 = vmul.f32 %v1566, %v1918
  %v1963 = vmul.f32 %v1567, %v1919
  %v1964 = vmul.f32 %v1568, %v1920
  %v1965 = vmul.f32 %v1569, %v1921
  %v1966 = vmul.f32 %v1570, %v1922
  %v1967 = vmul.f32 %v1571, %v1923
  %v1968 = vmul.f32 %v1572, %v1924
  %v1969 = vmul.f32 %v1573, %v1925
  %v1970 = vmul.f32 %v1574, %v1926
  %v1971 = vmul.f32 %v1575, %v1927
  %v1972 = vmul.f32 %v1576, %v1928
  %v1973 = vmul.f32 %v1577, %v1929
  %v1974 = vmul.f32 %v1578, %v1930
  %2019 = vrot.lane.b32.xlu0 %v1931, 1
  %v2020 = vpop.permute.xlu0 %2019
  %2021 = vrot.lane.b32.xlu0 %v1932, 1
  %v2022 = vpop.permute.xlu0 %2021
  %2023 = vrot.lane.b32.xlu0 %v1933, 1
  %v2024 = vpop.permute.xlu0 %2023
  %2025 = vrot.lane.b32.xlu0 %v1934, 1
  %v2026 = vpop.permute.xlu0 %2025
  %2027 = vrot.lane.b32.xlu0 %v1935, 1
  %v2028 = vpop.permute.xlu0 %2027
  %2029 = vrot.lane.b32.xlu0 %v1936, 1
  %v2030 = vpop.permute.xlu0 %2029
  %2031 = vrot.lane.b32.xlu0 %v1937, 1
  %v2032 = vpop.permute.xlu0 %2031
  %2033 = vrot.lane.b32.xlu0 %v1938, 1
  %v2034 = vpop.permute.xlu0 %2033
  %2035 = vrot.lane.b32.xlu0 %v1939, 1
  %v2036 = vpop.permute.xlu0 %2035
  %2037 = vrot.lane.b32.xlu0 %v1940, 1
  %v2038 = vpop.permute.xlu0 %2037
  %2039 = vrot.lane.b32.xlu0 %v1941, 1
  %v2040 = vpop.permute.xlu0 %2039
  %2041 = vrot.lane.b32.xlu0 %v1942, 1
  %v2042 = vpop.permute.xlu0 %2041
  %2043 = vrot.lane.b32.xlu0 %v1943, 1
  %v2044 = vpop.permute.xlu0 %2043
  %2045 = vrot.lane.b32.xlu0 %v1944, 1
  %v2046 = vpop.permute.xlu0 %2045
  %2047 = vrot.lane.b32.xlu0 %v1945, 1
  %v2048 = vpop.permute.xlu0 %2047
  %2049 = vrot.lane.b32.xlu0 %v1946, 1
  %v2050 = vpop.permute.xlu0 %2049
  %2051 = vrot.lane.b32.xlu0 %v1947, 1
  %v2052 = vpop.permute.xlu0 %2051
  %2053 = vrot.lane.b32.xlu0 %v1948, 1
  %v2054 = vpop.permute.xlu0 %2053
  %2055 = vrot.lane.b32.xlu0 %v1949, 1
  %v2056 = vpop.permute.xlu0 %2055
  %2057 = vrot.lane.b32.xlu0 %v1950, 1
  %v2058 = vpop.permute.xlu0 %2057
  %2059 = vrot.lane.b32.xlu0 %v1951, 1
  %v2060 = vpop.permute.xlu0 %2059
  %2061 = vrot.lane.b32.xlu0 %v1952, 1
  %v2062 = vpop.permute.xlu0 %2061
  %2063 = vrot.lane.b32.xlu0 %v1953, 1
  %v2064 = vpop.permute.xlu0 %2063
  %2065 = vrot.lane.b32.xlu0 %v1954, 1
  %v2066 = vpop.permute.xlu0 %2065
  %2067 = vrot.lane.b32.xlu0 %v1955, 1
  %v2068 = vpop.permute.xlu0 %2067
  %2069 = vrot.lane.b32.xlu0 %v1956, 1
  %v2070 = vpop.permute.xlu0 %2069
  %2071 = vrot.lane.b32.xlu0 %v1957, 1
  %v2072 = vpop.permute.xlu0 %2071
  %2073 = vrot.lane.b32.xlu0 %v1958, 1
  %v2074 = vpop.permute.xlu0 %2073
  %2075 = vrot.lane.b32.xlu0 %v1959, 1
  %v2076 = vpop.permute.xlu0 %2075
  %2077 = vrot.lane.b32.xlu0 %v1960, 1
  %v2078 = vpop.permute.xlu0 %2077
  %2079 = vrot.lane.b32.xlu0 %v1961, 1
  %v2080 = vpop.permute.xlu0 %2079
  %2081 = vrot.lane.b32.xlu0 %v1962, 1
  %v2082 = vpop.permute.xlu0 %2081
  %2083 = vrot.lane.b32.xlu0 %v1963, 1
  %v2084 = vpop.permute.xlu0 %2083
  %2085 = vrot.lane.b32.xlu0 %v1964, 1
  %v2086 = vpop.permute.xlu0 %2085
  %2087 = vrot.lane.b32.xlu0 %v1965, 1
  %v2088 = vpop.permute.xlu0 %2087
  %2089 = vrot.lane.b32.xlu0 %v1966, 1
  %v2090 = vpop.permute.xlu0 %2089
  %2091 = vrot.lane.b32.xlu0 %v1967, 1
  %v2092 = vpop.permute.xlu0 %2091
  %2093 = vrot.lane.b32.xlu0 %v1968, 1
  %v2094 = vpop.permute.xlu0 %2093
  %2095 = vrot.lane.b32.xlu0 %v1969, 1
  %v2096 = vpop.permute.xlu0 %2095
  %2097 = vrot.lane.b32.xlu0 %v1970, 1
  %v2098 = vpop.permute.xlu0 %2097
  %2099 = vrot.lane.b32.xlu0 %v1971, 1
  %v2100 = vpop.permute.xlu0 %2099
  %2101 = vrot.lane.b32.xlu0 %v1972, 1
  %v2102 = vpop.permute.xlu0 %2101
  %2103 = vrot.lane.b32.xlu0 %v1973, 1
  %v2104 = vpop.permute.xlu0 %2103
  %2105 = vrot.lane.b32.xlu0 %v1974, 1
  %v2106 = vpop.permute.xlu0 %2105
  %v2151 = vsub.f32 %v1755, %v2020
  %v2152 = vsub.f32 %v1756, %v2022
  %v2153 = vsub.f32 %v1757, %v2024
  %v2154 = vsub.f32 %v1758, %v2026
  %v2155 = vsub.f32 %v1759, %v2028
  %v2156 = vsub.f32 %v1760, %v2030
  %v2157 = vsub.f32 %v1761, %v2032
  %v2158 = vsub.f32 %v1762, %v2034
  %v2159 = vsub.f32 %v1763, %v2036
  %v2160 = vsub.f32 %v1764, %v2038
  %v2161 = vsub.f32 %v1765, %v2040
  %v2162 = vsub.f32 %v1766, %v2042
  %v2163 = vsub.f32 %v1767, %v2044
  %v2164 = vsub.f32 %v1768, %v2046
  %v2165 = vsub.f32 %v1769, %v2048
  %v2166 = vsub.f32 %v1770, %v2050
  %v2167 = vsub.f32 %v1771, %v2052
  %v2168 = vsub.f32 %v1772, %v2054
  %v2169 = vsub.f32 %v1773, %v2056
  %v2170 = vsub.f32 %v1774, %v2058
  %v2171 = vsub.f32 %v1775, %v2060
  %v2172 = vsub.f32 %v1776, %v2062
  %v2173 = vsub.f32 %v1777, %v2064
  %v2174 = vsub.f32 %v1778, %v2066
  %v2175 = vsub.f32 %v1779, %v2068
  %v2176 = vsub.f32 %v1780, %v2070
  %v2177 = vsub.f32 %v1781, %v2072
  %v2178 = vsub.f32 %v1782, %v2074
  %v2179 = vsub.f32 %v1783, %v2076
  %v2180 = vsub.f32 %v1784, %v2078
  %v2181 = vsub.f32 %v1785, %v2080
  %v2182 = vsub.f32 %v1786, %v2082
  %v2183 = vsub.f32 %v1787, %v2084
  %v2184 = vsub.f32 %v1788, %v2086
  %v2185 = vsub.f32 %v1789, %v2088
  %v2186 = vsub.f32 %v1790, %v2090
  %v2187 = vsub.f32 %v1791, %v2092
  %v2188 = vsub.f32 %v1792, %v2094
  %v2189 = vsub.f32 %v1793, %v2096
  %v2190 = vsub.f32 %v1794, %v2098
  %v2191 = vsub.f32 %v1795, %v2100
  %v2192 = vsub.f32 %v1796, %v2102
  %v2193 = vsub.f32 %v1797, %v2104
  %v2194 = vsub.f32 %v1798, %v2106
  %2196 = vset.pattern.permute.xlu0 0
  %2197 = vperm.xlu0 %2196, %v1887
  %v2198 = vpop.permute.xlu0 %2197
  %2201 = vset.pattern.permute.xlu0 0
  %2202 = vperm.xlu0 %2201, %v1888
  %v2203 = vpop.permute.xlu0 %2202
  %2206 = vset.pattern.permute.xlu0 0
  %2207 = vperm.xlu0 %2206, %v1889
  %v2208 = vpop.permute.xlu0 %2207
  %2211 = vset.pattern.permute.xlu0 0
  %2212 = vperm.xlu0 %2211, %v1890
  %v2213 = vpop.permute.xlu0 %2212
  %2216 = vset.pattern.permute.xlu0 0
  %2217 = vperm.xlu0 %2216, %v1891
  %v2218 = vpop.permute.xlu0 %2217
  %2221 = vset.pattern.permute.xlu0 0
  %2222 = vperm.xlu0 %2221, %v1892
  %v2223 = vpop.permute.xlu0 %2222
  %2226 = vset.pattern.permute.xlu0 0
  %2227 = vperm.xlu0 %2226, %v1893
  %v2228 = vpop.permute.xlu0 %2227
  %2231 = vset.pattern.permute.xlu0 0
  %2232 = vperm.xlu0 %2231, %v1894
  %v2233 = vpop.permute.xlu0 %2232
  %2236 = vset.pattern.permute.xlu0 0
  %2237 = vperm.xlu0 %2236, %v1895
  %v2238 = vpop.permute.xlu0 %2237
  %2241 = vset.pattern.permute.xlu0 0
  %2242 = vperm.xlu0 %2241, %v1896
  %v2243 = vpop.permute.xlu0 %2242
  %2246 = vset.pattern.permute.xlu0 0
  %2247 = vperm.xlu0 %2246, %v1897
  %v2248 = vpop.permute.xlu0 %2247
  %2251 = vset.pattern.permute.xlu0 0
  %2252 = vperm.xlu0 %2251, %v1898
  %v2253 = vpop.permute.xlu0 %2252
  %2256 = vset.pattern.permute.xlu0 0
  %2257 = vperm.xlu0 %2256, %v1899
  %v2258 = vpop.permute.xlu0 %2257
  %2261 = vset.pattern.permute.xlu0 0
  %2262 = vperm.xlu0 %2261, %v1900
  %v2263 = vpop.permute.xlu0 %2262
  %2266 = vset.pattern.permute.xlu0 0
  %2267 = vperm.xlu0 %2266, %v1901
  %v2268 = vpop.permute.xlu0 %2267
  %2271 = vset.pattern.permute.xlu0 0
  %2272 = vperm.xlu0 %2271, %v1902
  %v2273 = vpop.permute.xlu0 %2272
  %2276 = vset.pattern.permute.xlu0 0
  %2277 = vperm.xlu0 %2276, %v1903
  %v2278 = vpop.permute.xlu0 %2277
  %2281 = vset.pattern.permute.xlu0 0
  %2282 = vperm.xlu0 %2281, %v1904
  %v2283 = vpop.permute.xlu0 %2282
  %2286 = vset.pattern.permute.xlu0 0
  %2287 = vperm.xlu0 %2286, %v1905
  %v2288 = vpop.permute.xlu0 %2287
  %2291 = vset.pattern.permute.xlu0 0
  %2292 = vperm.xlu0 %2291, %v1906
  %v2293 = vpop.permute.xlu0 %2292
  %2296 = vset.pattern.permute.xlu0 0
  %2297 = vperm.xlu0 %2296, %v1907
  %v2298 = vpop.permute.xlu0 %2297
  %2301 = vset.pattern.permute.xlu0 0
  %2302 = vperm.xlu0 %2301, %v1908
  %v2303 = vpop.permute.xlu0 %2302
  %2306 = vset.pattern.permute.xlu0 0
  %2307 = vperm.xlu0 %2306, %v1909
  %v2308 = vpop.permute.xlu0 %2307
  %2311 = vset.pattern.permute.xlu0 0
  %2312 = vperm.xlu0 %2311, %v1910
  %v2313 = vpop.permute.xlu0 %2312
  %2316 = vset.pattern.permute.xlu0 0
  %2317 = vperm.xlu0 %2316, %v1911
  %v2318 = vpop.permute.xlu0 %2317
  %2321 = vset.pattern.permute.xlu0 0
  %2322 = vperm.xlu0 %2321, %v1912
  %v2323 = vpop.permute.xlu0 %2322
  %2326 = vset.pattern.permute.xlu0 0
  %2327 = vperm.xlu0 %2326, %v1913
  %v2328 = vpop.permute.xlu0 %2327
  %2331 = vset.pattern.permute.xlu0 0
  %2332 = vperm.xlu0 %2331, %v1914
  %v2333 = vpop.permute.xlu0 %2332
  %2336 = vset.pattern.permute.xlu0 0
  %2337 = vperm.xlu0 %2336, %v1915
  %v2338 = vpop.permute.xlu0 %2337
  %2341 = vset.pattern.permute.xlu0 0
  %2342 = vperm.xlu0 %2341, %v1916
  %v2343 = vpop.permute.xlu0 %2342
  %2346 = vset.pattern.permute.xlu0 0
  %2347 = vperm.xlu0 %2346, %v1917
  %v2348 = vpop.permute.xlu0 %2347
  %2351 = vset.pattern.permute.xlu0 0
  %2352 = vperm.xlu0 %2351, %v1918
  %v2353 = vpop.permute.xlu0 %2352
  %2356 = vset.pattern.permute.xlu0 0
  %2357 = vperm.xlu0 %2356, %v1919
  %v2358 = vpop.permute.xlu0 %2357
  %2361 = vset.pattern.permute.xlu0 0
  %2362 = vperm.xlu0 %2361, %v1920
  %v2363 = vpop.permute.xlu0 %2362
  %2366 = vset.pattern.permute.xlu0 0
  %2367 = vperm.xlu0 %2366, %v1921
  %v2368 = vpop.permute.xlu0 %2367
  %2371 = vset.pattern.permute.xlu0 0
  %2372 = vperm.xlu0 %2371, %v1922
  %v2373 = vpop.permute.xlu0 %2372
  %2376 = vset.pattern.permute.xlu0 0
  %2377 = vperm.xlu0 %2376, %v1923
  %v2378 = vpop.permute.xlu0 %2377
  %2381 = vset.pattern.permute.xlu0 0
  %2382 = vperm.xlu0 %2381, %v1924
  %v2383 = vpop.permute.xlu0 %2382
  %2386 = vset.pattern.permute.xlu0 0
  %2387 = vperm.xlu0 %2386, %v1925
  %v2388 = vpop.permute.xlu0 %2387
  %2391 = vset.pattern.permute.xlu0 0
  %2392 = vperm.xlu0 %2391, %v1926
  %v2393 = vpop.permute.xlu0 %2392
  %2396 = vset.pattern.permute.xlu0 0
  %2397 = vperm.xlu0 %2396, %v1927
  %v2398 = vpop.permute.xlu0 %2397
  %2401 = vset.pattern.permute.xlu0 0
  %2402 = vperm.xlu0 %2401, %v1928
  %v2403 = vpop.permute.xlu0 %2402
  %2406 = vset.pattern.permute.xlu0 0
  %2407 = vperm.xlu0 %2406, %v1929
  %v2408 = vpop.permute.xlu0 %2407
  %2411 = vset.pattern.permute.xlu0 0
  %2412 = vperm.xlu0 %2411, %v1930
  %v2413 = vpop.permute.xlu0 %2412
  %v2415 = vmul.f32 %v1007, %v2198
  %v2416 = vmul.f32 %v1008, %v2198
  %v2417 = vmul.f32 %v1009, %v2203
  %v2418 = vmul.f32 %v1010, %v2203
  %v2419 = vmul.f32 %v1011, %v2208
  %v2420 = vmul.f32 %v1012, %v2208
  %v2421 = vmul.f32 %v1013, %v2213
  %v2422 = vmul.f32 %v1014, %v2213
  %v2423 = vmul.f32 %v1015, %v2218
  %v2424 = vmul.f32 %v1016, %v2218
  %v2425 = vmul.f32 %v1017, %v2223
  %v2426 = vmul.f32 %v1018, %v2223
  %v2427 = vmul.f32 %v1019, %v2228
  %v2428 = vmul.f32 %v1020, %v2228
  %v2429 = vmul.f32 %v1021, %v2233
  %v2430 = vmul.f32 %v1022, %v2233
  %v2431 = vmul.f32 %v1023, %v2238
  %v2432 = vmul.f32 %v1024, %v2238
  %v2433 = vmul.f32 %v1025, %v2243
  %v2434 = vmul.f32 %v1026, %v2243
  %v2435 = vmul.f32 %v1027, %v2248
  %v2436 = vmul.f32 %v1028, %v2248
  %v2437 = vmul.f32 %v1029, %v2253
  %v2438 = vmul.f32 %v1030, %v2253
  %v2439 = vmul.f32 %v1031, %v2258
  %v2440 = vmul.f32 %v1032, %v2258
  %v2441 = vmul.f32 %v1033, %v2263
  %v2442 = vmul.f32 %v1034, %v2263
  %v2443 = vmul.f32 %v1035, %v2268
  %v2444 = vmul.f32 %v1036, %v2268
  %v2445 = vmul.f32 %v1037, %v2273
  %v2446 = vmul.f32 %v1038, %v2273
  %v2447 = vmul.f32 %v1039, %v2278
  %v2448 = vmul.f32 %v1040, %v2278
  %v2449 = vmul.f32 %v1041, %v2283
  %v2450 = vmul.f32 %v1042, %v2283
  %v2451 = vmul.f32 %v1043, %v2288
  %v2452 = vmul.f32 %v1044, %v2288
  %v2453 = vmul.f32 %v1045, %v2293
  %v2454 = vmul.f32 %v1046, %v2293
  %v2455 = vmul.f32 %v1047, %v2298
  %v2456 = vmul.f32 %v1048, %v2298
  %v2457 = vmul.f32 %v1049, %v2303
  %v2458 = vmul.f32 %v1050, %v2303
  %v2459 = vmul.f32 %v1051, %v2308
  %v2460 = vmul.f32 %v1052, %v2308
  %v2461 = vmul.f32 %v1053, %v2313
  %v2462 = vmul.f32 %v1054, %v2313
  %v2463 = vmul.f32 %v1055, %v2318
  %v2464 = vmul.f32 %v1056, %v2318
  %v2465 = vmul.f32 %v1057, %v2323
  %v2466 = vmul.f32 %v1058, %v2323
  %v2467 = vmul.f32 %v1059, %v2328
  %v2468 = vmul.f32 %v1060, %v2328
  %v2469 = vmul.f32 %v1061, %v2333
  %v2470 = vmul.f32 %v1062, %v2333
  %v2471 = vmul.f32 %v1063, %v2338
  %v2472 = vmul.f32 %v1064, %v2338
  %v2473 = vmul.f32 %v1065, %v2343
  %v2474 = vmul.f32 %v1066, %v2343
  %v2475 = vmul.f32 %v1067, %v2348
  %v2476 = vmul.f32 %v1068, %v2348
  %v2477 = vmul.f32 %v1069, %v2353
  %v2478 = vmul.f32 %v1070, %v2353
  %v2479 = vmul.f32 %v1071, %v2358
  %v2480 = vmul.f32 %v1072, %v2358
  %v2481 = vmul.f32 %v1073, %v2363
  %v2482 = vmul.f32 %v1074, %v2363
  %v2483 = vmul.f32 %v1075, %v2368
  %v2484 = vmul.f32 %v1076, %v2368
  %v2485 = vmul.f32 %v1077, %v2373
  %v2486 = vmul.f32 %v1078, %v2373
  %v2487 = vmul.f32 %v1079, %v2378
  %v2488 = vmul.f32 %v1080, %v2378
  %v2489 = vmul.f32 %v1081, %v2383
  %v2490 = vmul.f32 %v1082, %v2383
  %v2491 = vmul.f32 %v1083, %v2388
  %v2492 = vmul.f32 %v1084, %v2388
  %v2493 = vmul.f32 %v1085, %v2393
  %v2494 = vmul.f32 %v1086, %v2393
  %v2495 = vmul.f32 %v1087, %v2398
  %v2496 = vmul.f32 %v1088, %v2398
  %v2497 = vmul.f32 %v1089, %v2403
  %v2498 = vmul.f32 %v1090, %v2403
  %v2499 = vmul.f32 %v1091, %v2408
  %v2500 = vmul.f32 %v1092, %v2408
  %v2501 = vmul.f32 %v1093, %v2413
  %v2502 = vmul.f32 %v1094, %v2413
  %2504 = vset.pattern.permute.xlu0 1
  %2505 = vperm.xlu0 %2504, %v2151
  %v2506 = vpop.permute.xlu0 %2505
  %2509 = vset.pattern.permute.xlu0 1
  %2510 = vperm.xlu0 %2509, %v2152
  %v2511 = vpop.permute.xlu0 %2510
  %2514 = vset.pattern.permute.xlu0 1
  %2515 = vperm.xlu0 %2514, %v2153
  %v2516 = vpop.permute.xlu0 %2515
  %2519 = vset.pattern.permute.xlu0 1
  %2520 = vperm.xlu0 %2519, %v2154
  %v2521 = vpop.permute.xlu0 %2520
  %2524 = vset.pattern.permute.xlu0 1
  %2525 = vperm.xlu0 %2524, %v2155
  %v2526 = vpop.permute.xlu0 %2525
  %2529 = vset.pattern.permute.xlu0 1
  %2530 = vperm.xlu0 %2529, %v2156
  %v2531 = vpop.permute.xlu0 %2530
  %2534 = vset.pattern.permute.xlu0 1
  %2535 = vperm.xlu0 %2534, %v2157
  %v2536 = vpop.permute.xlu0 %2535
  %2539 = vset.pattern.permute.xlu0 1
  %2540 = vperm.xlu0 %2539, %v2158
  %v2541 = vpop.permute.xlu0 %2540
  %2544 = vset.pattern.permute.xlu0 1
  %2545 = vperm.xlu0 %2544, %v2159
  %v2546 = vpop.permute.xlu0 %2545
  %2549 = vset.pattern.permute.xlu0 1
  %2550 = vperm.xlu0 %2549, %v2160
  %v2551 = vpop.permute.xlu0 %2550
  %2554 = vset.pattern.permute.xlu0 1
  %2555 = vperm.xlu0 %2554, %v2161
  %v2556 = vpop.permute.xlu0 %2555
  %2559 = vset.pattern.permute.xlu0 1
  %2560 = vperm.xlu0 %2559, %v2162
  %v2561 = vpop.permute.xlu0 %2560
  %2564 = vset.pattern.permute.xlu0 1
  %2565 = vperm.xlu0 %2564, %v2163
  %v2566 = vpop.permute.xlu0 %2565
  %2569 = vset.pattern.permute.xlu0 1
  %2570 = vperm.xlu0 %2569, %v2164
  %v2571 = vpop.permute.xlu0 %2570
  %2574 = vset.pattern.permute.xlu0 1
  %2575 = vperm.xlu0 %2574, %v2165
  %v2576 = vpop.permute.xlu0 %2575
  %2579 = vset.pattern.permute.xlu0 1
  %2580 = vperm.xlu0 %2579, %v2166
  %v2581 = vpop.permute.xlu0 %2580
  %2584 = vset.pattern.permute.xlu0 1
  %2585 = vperm.xlu0 %2584, %v2167
  %v2586 = vpop.permute.xlu0 %2585
  %2589 = vset.pattern.permute.xlu0 1
  %2590 = vperm.xlu0 %2589, %v2168
  %v2591 = vpop.permute.xlu0 %2590
  %2594 = vset.pattern.permute.xlu0 1
  %2595 = vperm.xlu0 %2594, %v2169
  %v2596 = vpop.permute.xlu0 %2595
  %2599 = vset.pattern.permute.xlu0 1
  %2600 = vperm.xlu0 %2599, %v2170
  %v2601 = vpop.permute.xlu0 %2600
  %2604 = vset.pattern.permute.xlu0 1
  %2605 = vperm.xlu0 %2604, %v2171
  %v2606 = vpop.permute.xlu0 %2605
  %2609 = vset.pattern.permute.xlu0 1
  %2610 = vperm.xlu0 %2609, %v2172
  %v2611 = vpop.permute.xlu0 %2610
  %2614 = vset.pattern.permute.xlu0 1
  %2615 = vperm.xlu0 %2614, %v2173
  %v2616 = vpop.permute.xlu0 %2615
  %2619 = vset.pattern.permute.xlu0 1
  %2620 = vperm.xlu0 %2619, %v2174
  %v2621 = vpop.permute.xlu0 %2620
  %2624 = vset.pattern.permute.xlu0 1
  %2625 = vperm.xlu0 %2624, %v2175
  %v2626 = vpop.permute.xlu0 %2625
  %2629 = vset.pattern.permute.xlu0 1
  %2630 = vperm.xlu0 %2629, %v2176
  %v2631 = vpop.permute.xlu0 %2630
  %2634 = vset.pattern.permute.xlu0 1
  %2635 = vperm.xlu0 %2634, %v2177
  %v2636 = vpop.permute.xlu0 %2635
  %2639 = vset.pattern.permute.xlu0 1
  %2640 = vperm.xlu0 %2639, %v2178
  %v2641 = vpop.permute.xlu0 %2640
  %2644 = vset.pattern.permute.xlu0 1
  %2645 = vperm.xlu0 %2644, %v2179
  %v2646 = vpop.permute.xlu0 %2645
  %2649 = vset.pattern.permute.xlu0 1
  %2650 = vperm.xlu0 %2649, %v2180
  %v2651 = vpop.permute.xlu0 %2650
  %2654 = vset.pattern.permute.xlu0 1
  %2655 = vperm.xlu0 %2654, %v2181
  %v2656 = vpop.permute.xlu0 %2655
  %2659 = vset.pattern.permute.xlu0 1
  %2660 = vperm.xlu0 %2659, %v2182
  %v2661 = vpop.permute.xlu0 %2660
  %2664 = vset.pattern.permute.xlu0 1
  %2665 = vperm.xlu0 %2664, %v2183
  %v2666 = vpop.permute.xlu0 %2665
  %2669 = vset.pattern.permute.xlu0 1
  %2670 = vperm.xlu0 %2669, %v2184
  %v2671 = vpop.permute.xlu0 %2670
  %2674 = vset.pattern.permute.xlu0 1
  %2675 = vperm.xlu0 %2674, %v2185
  %v2676 = vpop.permute.xlu0 %2675
  %2679 = vset.pattern.permute.xlu0 1
  %2680 = vperm.xlu0 %2679, %v2186
  %v2681 = vpop.permute.xlu0 %2680
  %2684 = vset.pattern.permute.xlu0 1
  %2685 = vperm.xlu0 %2684, %v2187
  %v2686 = vpop.permute.xlu0 %2685
  %2689 = vset.pattern.permute.xlu0 1
  %2690 = vperm.xlu0 %2689, %v2188
  %v2691 = vpop.permute.xlu0 %2690
  %2694 = vset.pattern.permute.xlu0 1
  %2695 = vperm.xlu0 %2694, %v2189
  %v2696 = vpop.permute.xlu0 %2695
  %2699 = vset.pattern.permute.xlu0 1
  %2700 = vperm.xlu0 %2699, %v2190
  %v2701 = vpop.permute.xlu0 %2700
  %2704 = vset.pattern.permute.xlu0 1
  %2705 = vperm.xlu0 %2704, %v2191
  %v2706 = vpop.permute.xlu0 %2705
  %2709 = vset.pattern.permute.xlu0 1
  %2710 = vperm.xlu0 %2709, %v2192
  %v2711 = vpop.permute.xlu0 %2710
  %2714 = vset.pattern.permute.xlu0 1
  %2715 = vperm.xlu0 %2714, %v2193
  %v2716 = vpop.permute.xlu0 %2715
  %2719 = vset.pattern.permute.xlu0 1
  %2720 = vperm.xlu0 %2719, %v2194
  %v2721 = vpop.permute.xlu0 %2720
  %v2723 = vadd.f32 %v2415, %v2506
  %v2724 = vadd.f32 %v2416, %v2506
  %v2725 = vadd.f32 %v2417, %v2511
  %v2726 = vadd.f32 %v2418, %v2511
  %v2727 = vadd.f32 %v2419, %v2516
  %v2728 = vadd.f32 %v2420, %v2516
  %v2729 = vadd.f32 %v2421, %v2521
  %v2730 = vadd.f32 %v2422, %v2521
  %v2731 = vadd.f32 %v2423, %v2526
  %v2732 = vadd.f32 %v2424, %v2526
  %v2733 = vadd.f32 %v2425, %v2531
  %v2734 = vadd.f32 %v2426, %v2531
  %v2735 = vadd.f32 %v2427, %v2536
  %v2736 = vadd.f32 %v2428, %v2536
  %v2737 = vadd.f32 %v2429, %v2541
  %v2738 = vadd.f32 %v2430, %v2541
  %v2739 = vadd.f32 %v2431, %v2546
  %v2740 = vadd.f32 %v2432, %v2546
  %v2741 = vadd.f32 %v2433, %v2551
  %v2742 = vadd.f32 %v2434, %v2551
  %v2743 = vadd.f32 %v2435, %v2556
  %v2744 = vadd.f32 %v2436, %v2556
  %v2745 = vadd.f32 %v2437, %v2561
  %v2746 = vadd.f32 %v2438, %v2561
  %v2747 = vadd.f32 %v2439, %v2566
  %v2748 = vadd.f32 %v2440, %v2566
  %v2749 = vadd.f32 %v2441, %v2571
  %v2750 = vadd.f32 %v2442, %v2571
  %v2751 = vadd.f32 %v2443, %v2576
  %v2752 = vadd.f32 %v2444, %v2576
  %v2753 = vadd.f32 %v2445, %v2581
  %v2754 = vadd.f32 %v2446, %v2581
  %v2755 = vadd.f32 %v2447, %v2586
  %v2756 = vadd.f32 %v2448, %v2586
  %v2757 = vadd.f32 %v2449, %v2591
  %v2758 = vadd.f32 %v2450, %v2591
  %v2759 = vadd.f32 %v2451, %v2596
  %v2760 = vadd.f32 %v2452, %v2596
  %v2761 = vadd.f32 %v2453, %v2601
  %v2762 = vadd.f32 %v2454, %v2601
  %v2763 = vadd.f32 %v2455, %v2606
  %v2764 = vadd.f32 %v2456, %v2606
  %v2765 = vadd.f32 %v2457, %v2611
  %v2766 = vadd.f32 %v2458, %v2611
  %v2767 = vadd.f32 %v2459, %v2616
  %v2768 = vadd.f32 %v2460, %v2616
  %v2769 = vadd.f32 %v2461, %v2621
  %v2770 = vadd.f32 %v2462, %v2621
  %v2771 = vadd.f32 %v2463, %v2626
  %v2772 = vadd.f32 %v2464, %v2626
  %v2773 = vadd.f32 %v2465, %v2631
  %v2774 = vadd.f32 %v2466, %v2631
  %v2775 = vadd.f32 %v2467, %v2636
  %v2776 = vadd.f32 %v2468, %v2636
  %v2777 = vadd.f32 %v2469, %v2641
  %v2778 = vadd.f32 %v2470, %v2641
  %v2779 = vadd.f32 %v2471, %v2646
  %v2780 = vadd.f32 %v2472, %v2646
  %v2781 = vadd.f32 %v2473, %v2651
  %v2782 = vadd.f32 %v2474, %v2651
  %v2783 = vadd.f32 %v2475, %v2656
  %v2784 = vadd.f32 %v2476, %v2656
  %v2785 = vadd.f32 %v2477, %v2661
  %v2786 = vadd.f32 %v2478, %v2661
  %v2787 = vadd.f32 %v2479, %v2666
  %v2788 = vadd.f32 %v2480, %v2666
  %v2789 = vadd.f32 %v2481, %v2671
  %v2790 = vadd.f32 %v2482, %v2671
  %v2791 = vadd.f32 %v2483, %v2676
  %v2792 = vadd.f32 %v2484, %v2676
  %v2793 = vadd.f32 %v2485, %v2681
  %v2794 = vadd.f32 %v2486, %v2681
  %v2795 = vadd.f32 %v2487, %v2686
  %v2796 = vadd.f32 %v2488, %v2686
  %v2797 = vadd.f32 %v2489, %v2691
  %v2798 = vadd.f32 %v2490, %v2691
  %v2799 = vadd.f32 %v2491, %v2696
  %v2800 = vadd.f32 %v2492, %v2696
  %v2801 = vadd.f32 %v2493, %v2701
  %v2802 = vadd.f32 %v2494, %v2701
  %v2803 = vadd.f32 %v2495, %v2706
  %v2804 = vadd.f32 %v2496, %v2706
  %v2805 = vadd.f32 %v2497, %v2711
  %v2806 = vadd.f32 %v2498, %v2711
  %v2807 = vadd.f32 %v2499, %v2716
  %v2808 = vadd.f32 %v2500, %v2716
  %v2809 = vadd.f32 %v2501, %v2721
  %v2810 = vadd.f32 %v2502, %v2721
  %2811 = vst [vmem:[%s3] sm:$0xff] %v2723
  %2812 = vst.msk [vmem:[%s3 + $0x8] sm:$0xff] %vm919, %v2724
  %2813 = vst [vmem:[%s3 + $0x10] sm:$0xff] %v2725
  %2814 = vst.msk [vmem:[%s3 + $0x18] sm:$0xff] %vm919, %v2726
  %2815 = vst [vmem:[%s3 + $0x20] sm:$0xff] %v2727
  %2816 = vst.msk [vmem:[%s3 + $0x28] sm:$0xff] %vm919, %v2728
  %2817 = vst [vmem:[%s3 + $0x30] sm:$0xff] %v2729
  %2818 = vst.msk [vmem:[%s3 + $0x38] sm:$0xff] %vm919, %v2730
  %2819 = vst [vmem:[%s3 + $0x40] sm:$0xff] %v2731
  %2820 = vst.msk [vmem:[%s3 + $0x48] sm:$0xff] %vm919, %v2732
  %2821 = vst [vmem:[%s3 + $0x50] sm:$0xff] %v2733
  %2822 = vst.msk [vmem:[%s3 + $0x58] sm:$0xff] %vm919, %v2734
  %2823 = vst [vmem:[%s3 + $0x60] sm:$0xff] %v2735
  %2824 = vst.msk [vmem:[%s3 + $0x68] sm:$0xff] %vm919, %v2736
  %2825 = vst [vmem:[%s3 + $0x70] sm:$0xff] %v2737
  %2826 = vst.msk [vmem:[%s3 + $0x78] sm:$0xff] %vm919, %v2738
  %2827 = vst [vmem:[%s3 + $0x80] sm:$0xff] %v2739
  %2828 = vst.msk [vmem:[%s3 + $0x88] sm:$0xff] %vm919, %v2740
  %2829 = vst [vmem:[%s3 + $0x90] sm:$0xff] %v2741
  %2830 = vst.msk [vmem:[%s3 + $0x98] sm:$0xff] %vm919, %v2742
  %2831 = vst [vmem:[%s3 + $0xa0] sm:$0xff] %v2743
  %2832 = vst.msk [vmem:[%s3 + $0xa8] sm:$0xff] %vm919, %v2744
  %2833 = vst [vmem:[%s3 + $0xb0] sm:$0xff] %v2745
  %2834 = vst.msk [vmem:[%s3 + $0xb8] sm:$0xff] %vm919, %v2746
  %2835 = vst [vmem:[%s3 + $0xc0] sm:$0xff] %v2747
  %2836 = vst.msk [vmem:[%s3 + $0xc8] sm:$0xff] %vm919, %v2748
  %2837 = vst [vmem:[%s3 + $0xd0] sm:$0xff] %v2749
  %2838 = vst.msk [vmem:[%s3 + $0xd8] sm:$0xff] %vm919, %v2750
  %2839 = vst [vmem:[%s3 + $0xe0] sm:$0xff] %v2751
  %2840 = vst.msk [vmem:[%s3 + $0xe8] sm:$0xff] %vm919, %v2752
  %2841 = vst [vmem:[%s3 + $0xf0] sm:$0xff] %v2753
  %2842 = vst.msk [vmem:[%s3 + $0xf8] sm:$0xff] %vm919, %v2754
  %2843 = vst [vmem:[%s3 + $0x100] sm:$0xff] %v2755
  %2844 = vst.msk [vmem:[%s3 + $0x108] sm:$0xff] %vm919, %v2756
  %2845 = vst [vmem:[%s3 + $0x110] sm:$0xff] %v2757
  %2846 = vst.msk [vmem:[%s3 + $0x118] sm:$0xff] %vm919, %v2758
  %2847 = vst [vmem:[%s3 + $0x120] sm:$0xff] %v2759
  %2848 = vst.msk [vmem:[%s3 + $0x128] sm:$0xff] %vm919, %v2760
  %2849 = vst [vmem:[%s3 + $0x130] sm:$0xff] %v2761
  %2850 = vst.msk [vmem:[%s3 + $0x138] sm:$0xff] %vm919, %v2762
  %2851 = vst [vmem:[%s3 + $0x140] sm:$0xff] %v2763
  %2852 = vst.msk [vmem:[%s3 + $0x148] sm:$0xff] %vm919, %v2764
  %2853 = vst [vmem:[%s3 + $0x150] sm:$0xff] %v2765
  %2854 = vst.msk [vmem:[%s3 + $0x158] sm:$0xff] %vm919, %v2766
  %2855 = vst [vmem:[%s3 + $0x160] sm:$0xff] %v2767
  %2856 = vst.msk [vmem:[%s3 + $0x168] sm:$0xff] %vm919, %v2768
  %2857 = vst [vmem:[%s3 + $0x170] sm:$0xff] %v2769
  %2858 = vst.msk [vmem:[%s3 + $0x178] sm:$0xff] %vm919, %v2770
  %2859 = vst [vmem:[%s3 + $0x180] sm:$0xff] %v2771
  %2860 = vst.msk [vmem:[%s3 + $0x188] sm:$0xff] %vm919, %v2772
  %2861 = vst [vmem:[%s3 + $0x190] sm:$0xff] %v2773
  %2862 = vst.msk [vmem:[%s3 + $0x198] sm:$0xff] %vm919, %v2774
  %2863 = vst [vmem:[%s3 + $0x1a0] sm:$0xff] %v2775
  %2864 = vst.msk [vmem:[%s3 + $0x1a8] sm:$0xff] %vm919, %v2776
  %2865 = vst [vmem:[%s3 + $0x1b0] sm:$0xff] %v2777
  %2866 = vst.msk [vmem:[%s3 + $0x1b8] sm:$0xff] %vm919, %v2778
  %2867 = vst [vmem:[%s3 + $0x1c0] sm:$0xff] %v2779
  %2868 = vst.msk [vmem:[%s3 + $0x1c8] sm:$0xff] %vm919, %v2780
  %2869 = vst [vmem:[%s3 + $0x1d0] sm:$0xff] %v2781
  %2870 = vst.msk [vmem:[%s3 + $0x1d8] sm:$0xff] %vm919, %v2782
  %2871 = vst [vmem:[%s3 + $0x1e0] sm:$0xff] %v2783
  %2872 = vst.msk [vmem:[%s3 + $0x1e8] sm:$0xff] %vm919, %v2784
  %2873 = vst [vmem:[%s3 + $0x1f0] sm:$0xff] %v2785
  %2874 = vst.msk [vmem:[%s3 + $0x1f8] sm:$0xff] %vm919, %v2786
  %2875 = vst [vmem:[%s3 + $0x200] sm:$0xff] %v2787
  %2876 = vst.msk [vmem:[%s3 + $0x208] sm:$0xff] %vm919, %v2788
  %2877 = vst [vmem:[%s3 + $0x210] sm:$0xff] %v2789
  %2878 = vst.msk [vmem:[%s3 + $0x218] sm:$0xff] %vm919, %v2790
  %2879 = vst [vmem:[%s3 + $0x220] sm:$0xff] %v2791
  %2880 = vst.msk [vmem:[%s3 + $0x228] sm:$0xff] %vm919, %v2792
  %2881 = vst [vmem:[%s3 + $0x230] sm:$0xff] %v2793
  %2882 = vst.msk [vmem:[%s3 + $0x238] sm:$0xff] %vm919, %v2794
  %2883 = vst [vmem:[%s3 + $0x240] sm:$0xff] %v2795
  %2884 = vst.msk [vmem:[%s3 + $0x248] sm:$0xff] %vm919, %v2796
  %2885 = vst [vmem:[%s3 + $0x250] sm:$0xff] %v2797
  %2886 = vst.msk [vmem:[%s3 + $0x258] sm:$0xff] %vm919, %v2798
  %2887 = vst [vmem:[%s3 + $0x260] sm:$0xff] %v2799
  %2888 = vst.msk [vmem:[%s3 + $0x268] sm:$0xff] %vm919, %v2800
  %2889 = vst [vmem:[%s3 + $0x270] sm:$0xff] %v2801
  %2890 = vst.msk [vmem:[%s3 + $0x278] sm:$0xff] %vm919, %v2802
  %2891 = vst [vmem:[%s3 + $0x280] sm:$0xff] %v2803
  %2892 = vst.msk [vmem:[%s3 + $0x288] sm:$0xff] %vm919, %v2804
  %2893 = vst [vmem:[%s3 + $0x290] sm:$0xff] %v2805
  %2894 = vst.msk [vmem:[%s3 + $0x298] sm:$0xff] %vm919, %v2806
  %2895 = vst [vmem:[%s3 + $0x2a0] sm:$0xff] %v2807
  %2896 = vst.msk [vmem:[%s3 + $0x2a8] sm:$0xff] %vm919, %v2808
  %2897 = vst [vmem:[%s3 + $0x2b0] sm:$0xff] %v2809
  %2898 = vst.msk [vmem:[%s3 + $0x2b8] sm:$0xff] %vm919, %v2810
  // Predicated region
  $region14: #{tpu_custom_call.1} parent=0 // pred_check
    _
  $region15: #{tpu_custom_call.1} parent=0 // pred_check_branch
    %2900 = sbr.rel (0) target = $region17
  $region16: #{tpu_custom_call.1} parent=0 // pred_region
    _
  $region17: #{tpu_custom_call.1} parent=0 // pred_fallthru
    _
  // Predicated region
  $region18: #{tpu_custom_call.1} parent=0 // pred_check
    _
  $region19: #{tpu_custom_call.1} parent=0 // pred_check_branch
    %2902 = sbr.rel (0) target = $region21
  $region20: #{tpu_custom_call.1} parent=0 // pred_region
    _
  $region21: #{tpu_custom_call.1} parent=0 // pred_fallthru
    _

</llo_original>
